<compile_context>
chip_gen: v7x
topology: tpu7x:2x2x1
jax: 0.10.0
libtpu: 0.0.40
codegen_flags: <defaults>
</compile_context>

<pallas_src>
import jax
import jax.numpy as jnp
import numpy as np
from jax.experimental import pallas as pl
from jax.experimental.pallas import tpu as pltpu


def _round_up(x, m):
    return (x + m - 1) // m * m


def _sublane_multiple(dtype):
    """Packed sublane tile height: 8 for 32-bit, 16 for 16-bit, 32 for 8-bit."""
    return max(8, 32 // jnp.dtype(dtype).itemsize)


def _vmem_capacity_bytes():
    try:
        return int(pltpu.get_tpu_info().vmem_capacity_bytes)
    except Exception:
        return 64 << 20  # conservative fallback (v7x per-TC VMEM)


def _choose_tile_n(n, in_feat, out_feat, itemsize, sub):
    """Largest row tile whose double-buffered working set fits the VMEM budget.

    Budget is generation-aware: ~half of physical VMEM (=> ~64 MiB on v5e/v6e,
    ~32 MiB on v7x).  The cap is byte-based (VMEM), not a fixed row count, so
    each grid step moves multiple MiB of DMA and amortizes the ~0.35 us/step
    pipeline overhead.
    """
    budget = min(_vmem_capacity_bytes() // 2, 64 << 20)
    per_row = (
        2 * (3 * in_feat * itemsize + 2 * 4)          # emb1+emb2+out+alpha, double-buffered
        + 4 * (2 * in_feat + 4 * out_feat + 16)       # f32 in-kernel intermediates
    )
    vmem_rows = max(int(budget // max(per_row, 1)), sub)
    if n <= vmem_rows:
        return _round_up(max(n, 1), sub)              # single grid step
    # Multi-step: take the biggest VMEM-fitting tile, but keep >= ~4 grid steps
    # so the software pipeline (and v7x's two TensorCores via "parallel") have
    # work to overlap / shard.
    tile = min(vmem_rows, max(_round_up(-(-n // 4), 128), 128))
    return max(sub, tile // sub * sub)


def attention_kernel(emb1_ref, emb2_ref, w_ref, u_ref, out_ref, alpha_ref):
    """Per-row-tile two-modality attention.

    For each row n:
      v_m   = tanh(emb_m[n] @ W)            m in {1, 2}
      s_m   = v_m . u + 1e-6
      alpha = softmax([s_1, s_2])
      out[n] = alpha_1 * emb1[n] + alpha_2 * emb2[n]
    """
    e1 = emb1_ref[...]                                    # (tn, in_feat)
    e2 = emb2_ref[...]                                    # (tn, in_feat)
    w = w_ref[...]                                        # (in_feat, out_feat)
    u = u_ref[...].astype(jnp.float32)                    # (1, out_feat)

    # Two MXU dots against the same resident W (no VMEM concat copy).
    v1 = jnp.tanh(jnp.dot(e1, w, preferred_element_type=jnp.float32))  # (tn, out_feat)
    v2 = jnp.tanh(jnp.dot(e2, w, preferred_element_type=jnp.float32))  # (tn, out_feat)

    # Per-row score: VPU multiply + cross-lane (XLU) reduce; keeps the MXU free
    # of width-1 drains.  (+1e-6 matches torch; softmax is shift-invariant.)
    s1 = jnp.sum(v1 * u, axis=-1, keepdims=True) + 1e-6   # (tn, 1)
    s2 = jnp.sum(v2 * u, axis=-1, keepdims=True) + 1e-6   # (tn, 1)

    # Numerically stable softmax over the 2-element modality axis.
    m = jnp.maximum(s1, s2)
    p1 = jnp.exp(s1 - m)
    p2 = jnp.exp(s2 - m)
    d = p1 + p2
    r = pl.reciprocal(d, approx=True)                     # EUP slot
    inv = r * (2.0 - d * r)                               # one NR step -> ~f32 accurate
    a1 = p1 * inv                                         # (tn, 1)
    a2 = p2 * inv                                         # (tn, 1)

    # emb_combined = alpha_1 * emb1 + alpha_2 * emb2  (== emb^T @ alpha)
    comb = a1 * e1.astype(jnp.float32) + a2 * e2.astype(jnp.float32)
    out_ref[...] = comb.astype(out_ref.dtype)

    # Narrow (tn, 2) alpha output -- 8 bytes/row of HBM writeback.
    alpha_ref[...] = jnp.concatenate([a1, a2], axis=1).astype(alpha_ref.dtype)


def reference(emb1, emb2, w_omega, u_omega):
    """Pure-JAX reference mirroring the torch forward exactly."""
    emb = jnp.stack([emb1, emb2], axis=1)                       # (N, 2, in_feat)
    v = jnp.tanh(jnp.einsum("nmi,io->nmo", emb, w_omega))       # (N, 2, out_feat)
    vu = jnp.einsum("nmo,ok->nmk", v, u_omega)[..., 0]          # (N, 2)
    alpha = jax.nn.softmax(vu + 1e-6, axis=1)                   # (N, 2)
    combined = jnp.einsum("nmi,nm->ni", emb, alpha)             # (N, in_feat)
    return combined, alpha


def attention_layer(emb1, emb2, w_omega, u_omega, *, tile_n=None,
                    min_rows_for_pallas=512):
    """Pallas wrapper.  emb1/emb2: (N, in_feat).  Returns (combined, alpha)."""
    N, in_feat = emb1.shape
    in_feat_w, out_feat = w_omega.shape
    if in_feat_w != in_feat:
        raise ValueError("w_omega first dim must equal in_feat")
    if u_omega.shape != (out_feat, 1):
        raise ValueError("u_omega must be (out_feat, 1)")

    # Tiny problems: fixed kernel/grid launch overhead dominates -> pure JAX.
    if tile_n is None and N < min_rows_for_pallas:
        combined, alpha = reference(emb1, emb2, w_omega, u_omega)
        return combined.astype(emb1.dtype), alpha.astype(jnp.float32)

    itemsize = jnp.dtype(emb1.dtype).itemsize
    sub = _sublane_multiple(emb1.dtype)
    if tile_n is None:
        tile_n = _choose_tile_n(N, in_feat, out_feat, itemsize, sub)
    tile_n = max(sub, _round_up(int(tile_n), sub))
    tile_n = min(tile_n, _round_up(N, sub))

    grid = (pl.cdiv(N, tile_n),)  # partial tail block allowed; writes are masked
    u_row = u_omega.reshape(1, out_feat)  # lane-major u for the VPU score reduce

    # VMEM estimate: double-buffered tiles + f32 intermediates + (2x) weights.
    est_vmem = (
        2 * tile_n * (3 * in_feat * itemsize + 2 * 4)
        + 4 * tile_n * (2 * in_feat + 4 * out_feat + 16)
        + 2 * 4 * (in_feat * out_feat + out_feat)
    )
    cap = _vmem_capacity_bytes()
    vmem_limit = int(min(cap * 3 // 4, max(32 << 20, est_vmem * 2)))
    vmem_limit = max(vmem_limit, est_vmem + (4 << 20))

    cost = pl.CostEstimate(
        flops=4 * N * in_feat * out_feat + 7 * N * in_feat + 6 * N * out_feat,
        transcendentals=2 * N * out_feat + 3 * N,
        bytes_accessed=(4 * N * in_feat * itemsize        # emb1+emb2 read, out write
                        + N * 2 * 4                       # alpha write
                        + 4 * (in_feat * out_feat + out_feat)),
    )

    # TODO(synk): once pipeline_mode=pl.Buffered(1) is verified on the target
    # jax version, apply it to the constant-index W/u specs to halve their
    # resident VMEM footprint for very large projections.
    grid_spec = pl.GridSpec(
        grid=grid,
        in_specs=[
            pl.BlockSpec((tile_n, in_feat), lambda i: (i, 0)),    # emb1 tile
            pl.BlockSpec((tile_n, in_feat), lambda i: (i, 0)),    # emb2 tile
            pl.BlockSpec((in_feat, out_feat), lambda i: (0, 0)),  # W, VMEM-resident
            pl.BlockSpec((1, out_feat), lambda i: (0, 0)),        # u row, VMEM-resident
        ],
        out_specs=(
            pl.BlockSpec((tile_n, in_feat), lambda i: (i, 0)),    # combined
            pl.BlockSpec((tile_n, 2), lambda i: (i, 0)),          # alpha (N, 2)
        ),
    )

    combined, alpha = pl.pallas_call(
        attention_kernel,
        out_shape=(
            jax.ShapeDtypeStruct((N, in_feat), emb1.dtype),
            jax.ShapeDtypeStruct((N, 2), jnp.float32),
        ),
        grid_spec=grid_spec,
        compiler_params=pltpu.CompilerParams(
            dimension_semantics=("parallel",),
            vmem_limit_bytes=vmem_limit,
        ),
        cost_estimate=cost,
    )(emb1, emb2, w_omega, u_row)

    return combined, alpha


def xavier_uniform(key, shape):
    fan_in, fan_out = shape[0], shape[1]
    bound = float(np.sqrt(6.0 / (fan_in + fan_out)))
    return jax.random.uniform(key, shape, jnp.float32, -bound, bound)


def _check(N, in_feat, out_feat, seed, *, tile_n=None, force_pallas=False):
    key = jax.random.PRNGKey(seed)
    k1, k2, kw, ku = jax.random.split(key, 4)
    emb1 = jax.random.normal(k1, (N, in_feat), jnp.float32)
    emb2 = jax.random.normal(k2, (N, in_feat), jnp.float32)
    w_omega = xavier_uniform(kw, (in_feat, out_feat))
    u_omega = xavier_uniform(ku, (out_feat, 1))

    min_rows = 0 if force_pallas else 512
    combined, alpha = attention_layer(emb1, emb2, w_omega, u_omega,
                                      tile_n=tile_n, min_rows_for_pallas=min_rows)
    jax.block_until_ready((combined, alpha))

    ref_combined, ref_alpha = reference(emb1, emb2, w_omega, u_omega)
    # Tolerance covers the EUP approximate reciprocal (+ one Newton step) used
    # for the softmax denominator; everything else is plain f32.
    np.testing.assert_allclose(np.asarray(combined), np.asarray(ref_combined),
                               rtol=2e-4, atol=2e-4)
    np.testing.assert_allclose(np.asarray(alpha), np.asarray(ref_alpha),
                               rtol=2e-4, atol=2e-4)


if __name__ == "__main__":
    # Small demo shapes consistent with the module (N rows, in_feat, out_feat).
    _check(N=8, in_feat=32, out_feat=16, seed=0)                      # pure-JAX fallback path
    _check(N=201, in_feat=32, out_feat=16, seed=0,
           tile_n=128, force_pallas=True)                             # multi-step grid + partial tail
    _check(N=1024, in_feat=32, out_feat=16, seed=0, force_pallas=True)  # single-tile kernel path
    print("KERNEL_OK")
</pallas_src>

<mosaic_0001>
module attributes {stable_mosaic.version = 11 : i64} {
  func.func @attention_kernel(%arg0: i32, %arg1: memref<128x32xf32, #tpu.memory_space<vmem>>, %arg2: memref<128x32xf32, #tpu.memory_space<vmem>>, %arg3: memref<32x16xf32, #tpu.memory_space<vmem>>, %arg4: memref<1x16xf32, #tpu.memory_space<vmem>>, %arg5: memref<128x32xf32, #tpu.memory_space<vmem>>, %arg6: memref<128x2xf32, #tpu.memory_space<vmem>>) attributes {dimension_semantics = [#tpu.dimension_semantics<parallel>], iteration_bounds = array<i64: 2>, scalar_prefetch = 0 : i64, scratch_operands = 0 : i64, tpu.core_type = #tpu.core_type<tc>, window_params = [{transform_indices = @transform_0, window_bounds = array<i64: 128, 32>}, {transform_indices = @transform_1, window_bounds = array<i64: 128, 32>}, {pipeline_mode = #tpu.pipeline_mode<synchronous>, transform_indices = @transform_2, window_bounds = array<i64: 32, 16>}, {pipeline_mode = #tpu.pipeline_mode<synchronous>, transform_indices = @transform_3, window_bounds = array<i64: 1, 16>}, {transform_indices = @transform_4, window_bounds = array<i64: 128, 32>}, {transform_indices = @transform_5, window_bounds = array<i64: 128, 2>}]} {
    %c0 = arith.constant 0 : index
    %c0_0 = arith.constant 0 : index
    %0 = vector.load %arg1[%c0, %c0_0] : memref<128x32xf32, #tpu.memory_space<vmem>>, vector<128x32xf32>
    %c0_1 = arith.constant 0 : index
    %c0_2 = arith.constant 0 : index
    %1 = vector.load %arg2[%c0_1, %c0_2] : memref<128x32xf32, #tpu.memory_space<vmem>>, vector<128x32xf32>
    %c0_3 = arith.constant 0 : index
    %c0_4 = arith.constant 0 : index
    %2 = vector.load %arg3[%c0_3, %c0_4] : memref<32x16xf32, #tpu.memory_space<vmem>>, vector<32x16xf32>
    %c0_5 = arith.constant 0 : index
    %c0_6 = arith.constant 0 : index
    %3 = vector.load %arg4[%c0_5, %c0_6] : memref<1x16xf32, #tpu.memory_space<vmem>>, vector<1x16xf32>
    %cst = arith.constant dense<0.000000e+00> : vector<128x16xf32>
    %4 = tpu.matmul %0, %2, %cst {dimension_numbers = #tpu.dot_dimension_numbers<[1], [0], [0], [1], [0, 0, 1, 1], [], []>} : vector<128x32xf32>, vector<32x16xf32>, vector<128x16xf32> -> vector<128x16xf32>
    %5 = math.tanh %4 : vector<128x16xf32>
    %cst_7 = arith.constant dense<0.000000e+00> : vector<128x16xf32>
    %6 = tpu.matmul %1, %2, %cst_7 {dimension_numbers = #tpu.dot_dimension_numbers<[1], [0], [0], [1], [0, 0, 1, 1], [], []>} : vector<128x32xf32>, vector<32x16xf32>, vector<128x16xf32> -> vector<128x16xf32>
    %7 = math.tanh %6 : vector<128x16xf32>
    %8 = vector.broadcast %3 : vector<1x16xf32> to vector<128x16xf32>
    %9 = arith.mulf %5, %8 : vector<128x16xf32>
    %cst_8 = arith.constant dense<0.000000e+00> : vector<128xf32>
    %10 = vector.multi_reduction <add>, %9, %cst_8 [1] : vector<128x16xf32> to vector<128xf32>
    %11 = vector.shape_cast %10 : vector<128xf32> to vector<128x1xf32>
    %cst_9 = arith.constant 9.99999997E-7 : f32
    %12 = vector.broadcast %cst_9 : f32 to vector<128x1xf32>
    %13 = arith.addf %11, %12 : vector<128x1xf32>
    %14 = vector.broadcast %3 : vector<1x16xf32> to vector<128x16xf32>
    %15 = arith.mulf %7, %14 : vector<128x16xf32>
    %cst_10 = arith.constant dense<0.000000e+00> : vector<128xf32>
    %16 = vector.multi_reduction <add>, %15, %cst_10 [1] : vector<128x16xf32> to vector<128xf32>
    %17 = vector.shape_cast %16 : vector<128xf32> to vector<128x1xf32>
    %cst_11 = arith.constant 9.99999997E-7 : f32
    %18 = vector.broadcast %cst_11 : f32 to vector<128x1xf32>
    %19 = arith.addf %17, %18 : vector<128x1xf32>
    %20 = arith.maximumf %13, %19 : vector<128x1xf32>
    %21 = arith.subf %13, %20 : vector<128x1xf32>
    %22 = math.exp %21 : vector<128x1xf32>
    %23 = arith.subf %19, %20 : vector<128x1xf32>
    %24 = math.exp %23 : vector<128x1xf32>
    %25 = arith.addf %22, %24 : vector<128x1xf32>
    %26 = tpu.reciprocal %25 {approx = true} : vector<128x1xf32> -> vector<128x1xf32>
    %27 = arith.mulf %25, %26 : vector<128x1xf32>
    %cst_12 = arith.constant 2.000000e+00 : f32
    %28 = vector.broadcast %cst_12 : f32 to vector<128x1xf32>
    %29 = arith.subf %28, %27 : vector<128x1xf32>
    %30 = arith.mulf %26, %29 : vector<128x1xf32>
    %31 = arith.mulf %22, %30 : vector<128x1xf32>
    %32 = arith.mulf %24, %30 : vector<128x1xf32>
    %33 = vector.broadcast %31 : vector<128x1xf32> to vector<128x32xf32>
    %34 = arith.mulf %33, %0 : vector<128x32xf32>
    %35 = vector.broadcast %32 : vector<128x1xf32> to vector<128x32xf32>
    %36 = arith.mulf %35, %1 : vector<128x32xf32>
    %37 = arith.addf %34, %36 : vector<128x32xf32>
    %c0_13 = arith.constant 0 : index
    %c0_14 = arith.constant 0 : index
    %38 = vector.load %arg5[%c0_13, %c0_14] : memref<128x32xf32, #tpu.memory_space<vmem>>, vector<128x32xf32>
    tpu.vector_store %arg5[%c0_13, %c0_14], %37 {strides = array<i32>} : memref<128x32xf32, #tpu.memory_space<vmem>>, vector<128x32xf32>,
    %39 = tpu.concatenate %31, %32 in 1 : vector<128x1xf32>, vector<128x1xf32> -> vector<128x2xf32>
    %c0_15 = arith.constant 0 : index
    %c0_16 = arith.constant 0 : index
    %40 = vector.load %arg6[%c0_15, %c0_16] : memref<128x2xf32, #tpu.memory_space<vmem>>, vector<128x2xf32>
    tpu.vector_store %arg6[%c0_15, %c0_16], %39 {strides = array<i32>} : memref<128x2xf32, #tpu.memory_space<vmem>>, vector<128x2xf32>,
    return
  }
  func.func @transform_0(%arg0: i32) -> (i32, i32) {
    %c0_i32 = arith.constant 0 : i32
    %c0_i32_0 = arith.constant 0 : i32
    return %arg0, %c0_i32 : i32, i32
  }
  func.func @transform_1(%arg0: i32) -> (i32, i32) {
    %c0_i32 = arith.constant 0 : i32
    %c0_i32_0 = arith.constant 0 : i32
    return %arg0, %c0_i32 : i32, i32
  }
  func.func @transform_2(%arg0: i32) -> (i32, i32) {
    %c0_i32 = arith.constant 0 : i32
    %c0_i32_0 = arith.constant 0 : i32
    %c0_i32_1 = arith.constant 0 : i32
    return %c0_i32, %c0_i32_0 : i32, i32
  }
  func.func @transform_3(%arg0: i32) -> (i32, i32) {
    %c0_i32 = arith.constant 0 : i32
    %c0_i32_0 = arith.constant 0 : i32
    %c0_i32_1 = arith.constant 0 : i32
    return %c0_i32, %c0_i32_0 : i32, i32
  }
  func.func @transform_4(%arg0: i32) -> (i32, i32) {
    %c0_i32 = arith.constant 0 : i32
    %c0_i32_0 = arith.constant 0 : i32
    return %arg0, %c0_i32 : i32, i32
  }
  func.func @transform_5(%arg0: i32) -> (i32, i32) {
    %c0_i32 = arith.constant 0 : i32
    %c0_i32_0 = arith.constant 0 : i32
    return %arg0, %c0_i32 : i32, i32
  }
}

</mosaic_0001>

<llo_original>
// kernel: tpu_custom_call.1
$region0: #{tpu_custom_call.1}
  #allocation0 [shape = 'u32[]', space=smem, size = 0x4, offset = 0x4, fixed_abs, tag = 'smem constant byte address 0x4 - core index']
  #allocation1 [shape = 'u32[144,128]{1,0:T(1,128)}', space=vmem, size = 0x12000, scoped, tag = 'internal scratch']
  %s0 = inlined_call_operand.vmem [shape: f32[201,32], index: 0, kind: input, shape index: {}]
  %s1 = inlined_call_operand.vmem [shape: f32[201,32], index: 1, kind: input, shape index: {}]
  %s2 = inlined_call_operand.vmem [shape: f32[32,16], index: 2, kind: input, shape index: {}]
  %s3 = inlined_call_operand.vmem [shape: f32[1,16], index: 3, kind: input, shape index: {}]
  %s4 = inlined_call_operand.vmem [shape: f32[201,32], index: 4, kind: output, shape index: {0}]
  %s5 = inlined_call_operand.vmem [shape: f32[201,2], index: 5, kind: output, shape index: {1}]
  %6 = xla_tuple %s4, %s5
  %s7 = sld [smem:[#allocation0]]
  $region153: #{tpu_custom_call.1} parent=0
    _
  %s9 = ssub.s32 1, %s7
  %s10 = scalar_select 0, %s9, %s7
  $region1: #{tpu_custom_call.1} parent=0
    #allocation2 [shape = 'u8[131072]{0}', space=vmem, size = 0x20000, scoped, tag = 'output window, operand 0']
    #allocation3 [shape = 'u8[131072]{0}', space=vmem, size = 0x20000, scoped, tag = 'output window, operand 1']
    loop: start=0, step=1, limit=4
    $region2: #{tpu_custom_call.1} parent=1 // loop_pre_header
      _
    $region3: #{tpu_custom_call.1} parent=1 // loop_header
      %s12 = sphi 0, %s16
      %p13 = scmp.ge.s32.totalorder %s12, 4
      %s22 = sphi 0, %s24
      %s25 = sphi 0, %s22
      %s26 = sphi 0, %s25
      %s42 = sphi 0, %s26
      %s48 = sphi 0, %s50
      %s51 = sphi 0, %s48
      %s52 = sphi 0, %s51
      %s68 = sphi 0, %s52
      %s72 = sphi 0, %s72
      %s74 = sphi 0, %s72
      %s75 = sphi 0, %s74
      %s89 = sphi 0, %s75
      %s93 = sphi 0, %s93
      %s95 = sphi 0, %s93
      %s96 = sphi 0, %s95
      %s110 = sphi 0, %s96
      %s116 = sphi 0, %s118
      %s119 = sphi 0, %s116
      %s120 = sphi 0, %s119
      %s136 = sphi 0, %s120
      %s142 = sphi 0, %s144
      %s145 = sphi 0, %s142
      %s146 = sphi 0, %s145
      %s162 = sphi 0, %s146
    $region4: #{tpu_custom_call.1} parent=1 // loop_header_branch
      %15 = sbr.rel (%p13) target = $region8
    $region5: #{tpu_custom_call.1} parent=1 // loop_body
      %s17 = ssub.s32 %s12, 1
      %s18 = ssub.s32 %s12, 2
      %s19 = sadd.s32 %s12, 1
      %s20 = ssub.s32 %s12, %s19
      %p21 = scmp.eq.s32.totalorder %s20, 0
      %s23 = sadd.s32 %s22, 1
      %s24 = scalar_select %p21, %s22, %s23
      %p27 = pneg %p21
      %p28 = scmp.eq.s32.totalorder %s12, 1
      %p29 = por %p27, %p28
      %p30 = scmp.ne.s32.totalorder %s22, %s25
      %p31 = scmp.eq.s32.totalorder %s12, 0
      %p32 = por %p30, %p31
      %p33 = scmp.ne.s32.totalorder %s22, %s25
      %p34 = scmp.eq.s32.totalorder %s17, 1
      %p35 = por %p33, %p34
      %p36 = scmp.ne.s32.totalorder %s25, %s26
      %p37 = scmp.eq.s32.totalorder %s17, 0
      %p38 = por %p36, %p37
      %p39 = scmp.ne.s32.totalorder %s25, %s26
      %p40 = scmp.eq.s32.totalorder %s18, 1
      %p41 = por %p39, %p40
      %p43 = scmp.ne.s32.totalorder %s26, %s42
      %p44 = scmp.eq.s32.totalorder %s18, 0
      %p45 = por %p43, %p44
      %s46 = ssub.s32 %s12, %s19
      %p47 = scmp.eq.s32.totalorder %s46, 0
      %s49 = sadd.s32 %s48, 1
      %s50 = scalar_select %p47, %s48, %s49
      %p53 = pneg %p47
      %p54 = scmp.eq.s32.totalorder %s12, 1
      %p55 = por %p53, %p54
      %p56 = scmp.ne.s32.totalorder %s48, %s51
      %p57 = scmp.eq.s32.totalorder %s12, 0
      %p58 = por %p56, %p57
      %p59 = scmp.ne.s32.totalorder %s48, %s51
      %p60 = scmp.eq.s32.totalorder %s17, 1
      %p61 = por %p59, %p60
      %p62 = scmp.ne.s32.totalorder %s51, %s52
      %p63 = scmp.eq.s32.totalorder %s17, 0
      %p64 = por %p62, %p63
      %p65 = scmp.ne.s32.totalorder %s51, %s52
      %p66 = scmp.eq.s32.totalorder %s18, 1
      %p67 = por %p65, %p66
      %p69 = scmp.ne.s32.totalorder %s52, %s68
      %p70 = scmp.eq.s32.totalorder %s18, 0
      %p71 = por %p69, %p70
      %s73 = sadd.s32 %s72, 1
      %p76 = scmp.eq.s32.totalorder %s12, 1
      %p77 = scmp.ne.s32.totalorder %s72, %s74
      %p78 = scmp.eq.s32.totalorder %s12, 0
      %p79 = por %p77, %p78
      %p80 = scmp.ne.s32.totalorder %s72, %s74
      %p81 = scmp.eq.s32.totalorder %s17, 1
      %p82 = por %p80, %p81
      %p83 = scmp.ne.s32.totalorder %s74, %s75
      %p84 = scmp.eq.s32.totalorder %s17, 0
      %p85 = por %p83, %p84
      %p86 = scmp.ne.s32.totalorder %s74, %s75
      %p87 = scmp.eq.s32.totalorder %s18, 1
      %p88 = por %p86, %p87
      %p90 = scmp.ne.s32.totalorder %s75, %s89
      %p91 = scmp.eq.s32.totalorder %s18, 0
      %p92 = por %p90, %p91
      %s94 = sadd.s32 %s93, 1
      %p97 = scmp.eq.s32.totalorder %s12, 1
      %p98 = scmp.ne.s32.totalorder %s93, %s95
      %p99 = scmp.eq.s32.totalorder %s12, 0
      %p100 = por %p98, %p99
      %p101 = scmp.ne.s32.totalorder %s93, %s95
      %p102 = scmp.eq.s32.totalorder %s17, 1
      %p103 = por %p101, %p102
      %p104 = scmp.ne.s32.totalorder %s95, %s96
      %p105 = scmp.eq.s32.totalorder %s17, 0
      %p106 = por %p104, %p105
      %p107 = scmp.ne.s32.totalorder %s95, %s96
      %p108 = scmp.eq.s32.totalorder %s18, 1
      %p109 = por %p107, %p108
      %p111 = scmp.ne.s32.totalorder %s96, %s110
      %p112 = scmp.eq.s32.totalorder %s18, 0
      %p113 = por %p111, %p112
      %s114 = ssub.s32 %s12, %s19
      %p115 = scmp.eq.s32.totalorder %s114, 0
      %s117 = sadd.s32 %s116, 1
      %s118 = scalar_select %p115, %s116, %s117
      %p121 = pneg %p115
      %p122 = scmp.eq.s32.totalorder %s12, 1
      %p123 = por %p121, %p122
      %p124 = scmp.ne.s32.totalorder %s116, %s119
      %p125 = scmp.eq.s32.totalorder %s12, 0
      %p126 = por %p124, %p125
      %p127 = scmp.ne.s32.totalorder %s116, %s119
      %p128 = scmp.eq.s32.totalorder %s17, 1
      %p129 = por %p127, %p128
      %p130 = scmp.ne.s32.totalorder %s119, %s120
      %p131 = scmp.eq.s32.totalorder %s17, 0
      %p132 = por %p130, %p131
      %p133 = scmp.ne.s32.totalorder %s119, %s120
      %p134 = scmp.eq.s32.totalorder %s18, 1
      %p135 = por %p133, %p134
      %p137 = scmp.ne.s32.totalorder %s120, %s136
      %p138 = scmp.eq.s32.totalorder %s18, 0
      %p139 = por %p137, %p138
      %s140 = ssub.s32 %s12, %s19
      %p141 = scmp.eq.s32.totalorder %s140, 0
      %s143 = sadd.s32 %s142, 1
      %s144 = scalar_select %p141, %s142, %s143
      %p147 = pneg %p141
      %p148 = scmp.eq.s32.totalorder %s12, 1
      %p149 = por %p147, %p148
      %p150 = scmp.ne.s32.totalorder %s142, %s145
      %p151 = scmp.eq.s32.totalorder %s12, 0
      %p152 = por %p150, %p151
      %p153 = scmp.ne.s32.totalorder %s142, %s145
      %p154 = scmp.eq.s32.totalorder %s17, 1
      %p155 = por %p153, %p154
      %p156 = scmp.ne.s32.totalorder %s145, %s146
      %p157 = scmp.eq.s32.totalorder %s17, 0
      %p158 = por %p156, %p157
      %p159 = scmp.ne.s32.totalorder %s145, %s146
      %p160 = scmp.eq.s32.totalorder %s18, 1
      %p161 = por %p159, %p160
      %p163 = scmp.ne.s32.totalorder %s146, %s162
      %p164 = scmp.eq.s32.totalorder %s18, 0
      %p165 = por %p163, %p164
      %p166 = scmp.le.s32.totalorder 1, %s12
      %p167 = scmp.lt.s32.totalorder %s12, 3
      %p168 = pnand %p166, %p167
      %p169 = pneg %p168
      // Predicated region
      $region9: #{tpu_custom_call.1} parent=5 // pred_check
        _
      $region10: #{tpu_custom_call.1} parent=5 // pred_check_branch
        %171 = sbr.rel (%p168) target = $region12
      $region11: #{tpu_custom_call.1} parent=5 // pred_region
        %s172 = ssub.s32 %s12, 1
        // Predicated region
        $region13: #{tpu_custom_call.1} parent=11 // pred_check
          %p173 = pneg %p85
        $region14: #{tpu_custom_call.1} parent=11 // pred_check_branch
          %175 = sbr.rel (%p173) target = $region16
        $region15: #{tpu_custom_call.1} parent=11 // pred_region
          _
        $region16: #{tpu_custom_call.1} parent=11 // pred_fallthru
          _
        // Predicated region
        $region17: #{tpu_custom_call.1} parent=11 // pred_check
          %p176 = pneg %p106
        $region18: #{tpu_custom_call.1} parent=11 // pred_check_branch
          %178 = sbr.rel (%p176) target = $region20
        $region19: #{tpu_custom_call.1} parent=11 // pred_region
          _
        $region20: #{tpu_custom_call.1} parent=11 // pred_fallthru
          _
      $region12: #{tpu_custom_call.1} parent=5 // pred_fallthru
        _
      %p179 = scmp.lt.s32.totalorder %s12, 2
      // Predicated region
      $region21: #{tpu_custom_call.1} parent=5 // pred_check
        %p180 = pneg %p179
      $region22: #{tpu_custom_call.1} parent=5 // pred_check_branch
        %182 = sbr.rel (%p180) target = $region24
      $region23: #{tpu_custom_call.1} parent=5 // pred_region
        // Predicated region
        $region25: #{tpu_custom_call.1} parent=23 // pred_check
          %p183 = pneg %p32
        $region26: #{tpu_custom_call.1} parent=23 // pred_check_branch
          %185 = sbr.rel (%p183) target = $region28
        $region27: #{tpu_custom_call.1} parent=23 // pred_region
          %s186 = smul.u32 16, %s12
          %s187 = ssub.s32 26, %s186
          %p188 = scmp.lt.s32.totalorder %s187, 16
          %s189 = scalar_select %p188, %s187, 16
          %s190 = smul.u32 128, %s189
          %p191 = scmp.lt.s32.totalorder %s186, 25
          %s192 = scalar_select %p191, %s186, 25
          %s193 = smul.addr %s192, 8
          %s194 = scalar_lea.vmem %s0, %s193
          %s195 = smul.u32 16, %s12
          %s196 = ssub.s32 26, %s195
          %p197 = scmp.lt.s32.totalorder %s196, 16
          %s198 = scalar_select %p197, %s196, 16
          %s199 = smul.u32 128, %s198
        $region28: #{tpu_custom_call.1} parent=23 // pred_fallthru
          _
        // Predicated region
        $region29: #{tpu_custom_call.1} parent=23 // pred_check
          %p200 = pneg %p58
        $region30: #{tpu_custom_call.1} parent=23 // pred_check_branch
          %202 = sbr.rel (%p200) target = $region32
        $region31: #{tpu_custom_call.1} parent=23 // pred_region
          %s203 = smul.u32 16, %s12
          %s204 = ssub.s32 26, %s203
          %p205 = scmp.lt.s32.totalorder %s204, 16
          %s206 = scalar_select %p205, %s204, 16
          %s207 = smul.u32 128, %s206
          %p208 = scmp.lt.s32.totalorder %s203, 25
          %s209 = scalar_select %p208, %s203, 25
          %s210 = smul.addr %s209, 8
          %s211 = scalar_lea.vmem %s1, %s210
          %s212 = smul.u32 16, %s12
          %s213 = ssub.s32 26, %s212
          %p214 = scmp.lt.s32.totalorder %s213, 16
          %s215 = scalar_select %p214, %s213, 16
          %s216 = smul.u32 128, %s215
        $region32: #{tpu_custom_call.1} parent=23 // pred_fallthru
          _
      $region24: #{tpu_custom_call.1} parent=5 // pred_fallthru
        _
      %p217 = scmp.le.s32.totalorder 1, %s12
      %p218 = scmp.lt.s32.totalorder %s12, 3
      %p219 = pnand %p217, %p218
      %p220 = pneg %p219
      // Predicated region
      $region33: #{tpu_custom_call.1} parent=5 // pred_check
        _
      $region34: #{tpu_custom_call.1} parent=5 // pred_check_branch
        %222 = sbr.rel (%p219) target = $region36
      $region35: #{tpu_custom_call.1} parent=5 // pred_region
        %s223 = ssub.s32 %s12, 1
        %s224 = smul.u32 16, %s17
        %s225 = ssub.s32 26, %s224
        %p226 = scmp.lt.s32.totalorder %s225, 16
        %s227 = scalar_select %p226, %s225, 16
        %s228 = smul.u32 128, %s227
        %p229 = scmp.lt.s32.totalorder %s224, 25
        %s230 = scalar_select %p229, %s224, 25
        %s231 = smul.addr %s230, 8
        %s232 = scalar_lea.vmem %s0, %s231
        %p233 = pneg %p38
        %p234 = pneg %p35
        %s235 = smul.u32 16, %s17
        %s236 = ssub.s32 26, %s235
        %p237 = scmp.lt.s32.totalorder %s236, 16
        %s238 = scalar_select %p237, %s236, 16
        %s239 = smul.u32 128, %s238
        %p240 = scmp.lt.s32.totalorder %s235, 25
        %s241 = scalar_select %p240, %s235, 25
        %s242 = smul.addr %s241, 8
        %s243 = scalar_lea.vmem %s1, %s242
        %p244 = pneg %p64
        %p245 = pneg %p61
        %p246 = pneg %p85
        %p247 = pneg %p82
        %p248 = pneg %p106
        %p249 = pneg %p103
        %p250 = pneg %p132
        %p251 = pneg %p129
        %s252 = sand.u32 %s119, 1
        %s253 = sand.u32 %s119, 1
        %s254 = smul.addr %s253, 128
        %s255 = scalar_lea.vmem [#allocation2], %s254
        %p256 = pneg %p158
        %p257 = pneg %p155
        %s258 = sand.u32 %s145, 1
        %s259 = sand.u32 %s145, 1
        %s260 = smul.addr %s259, 128
        %s261 = scalar_lea.vmem [#allocation3], %s260
        %s262 = smul.u32 16, %s17
        %s263 = ssub.s32 26, %s262
        %p264 = scmp.lt.s32.totalorder %s263, 16
        %s265 = scalar_select %p264, %s263, 16
        %s266 = smul.u32 128, %s265
        %p267 = scmp.lt.s32.totalorder %s262, 25
        %s268 = scalar_select %p267, %s262, 25
        %s269 = smul.addr %s268, 8
        %s270 = scalar_lea.vmem %s0, %s269
        %s271 = smul.u32 16, %s17
        %s272 = ssub.s32 26, %s271
        %p273 = scmp.lt.s32.totalorder %s272, 16
        %s274 = scalar_select %p273, %s272, 16
        %s275 = smul.u32 128, %s274
        %s276 = smul.u32 16, %s17
        %s277 = ssub.s32 26, %s276
        %p278 = scmp.lt.s32.totalorder %s277, 16
        %s279 = scalar_select %p278, %s277, 16
        %s280 = smul.u32 128, %s279
        %p281 = scmp.lt.s32.totalorder %s276, 25
        %s282 = scalar_select %p281, %s276, 25
        %s283 = smul.addr %s282, 8
        %s284 = scalar_lea.vmem %s1, %s283
        %s285 = smul.u32 16, %s17
        %s286 = ssub.s32 26, %s285
        %p287 = scmp.lt.s32.totalorder %s286, 16
        %s288 = scalar_select %p287, %s286, 16
        %s289 = smul.u32 128, %s288
        %s290 = smul.u32 16, %s17
        %s291 = ssub.s32 26, %s290
        %p292 = scmp.lt.s32.totalorder %s291, 16
        %s293 = scalar_select %p292, %s291, 16
        %s294 = smul.u32 128, %s293
        %s295 = smul.u32 16, %s17
        %s296 = ssub.s32 26, %s295
        %p297 = scmp.lt.s32.totalorder %s296, 16
        %s298 = scalar_select %p297, %s296, 16
        %s299 = smul.u32 128, %s298
        %v300 = vld [vmem:[%s270] sm:$0xff]
        %v301 = vld [vmem:[%s270 + $0x8] sm:$0xff]
        %v302 = vld [vmem:[%s270 + $0x10] sm:$0xff]
        %v303 = vld [vmem:[%s270 + $0x18] sm:$0xff]
        %v304 = vld [vmem:[%s270 + $0x20] sm:$0xff]
        %v305 = vld [vmem:[%s270 + $0x28] sm:$0xff]
        %v306 = vld [vmem:[%s270 + $0x30] sm:$0xff]
        %v307 = vld [vmem:[%s270 + $0x38] sm:$0xff]
        %v308 = vld [vmem:[%s270 + $0x40] sm:$0xff]
        %v309 = vld [vmem:[%s270 + $0x48] sm:$0xff]
        %v310 = vld [vmem:[%s270 + $0x50] sm:$0xff]
        %v311 = vld [vmem:[%s270 + $0x58] sm:$0xff]
        %v312 = vld [vmem:[%s270 + $0x60] sm:$0xff]
        %v313 = vld [vmem:[%s270 + $0x68] sm:$0xff]
        %v314 = vld [vmem:[%s270 + $0x70] sm:$0xff]
        %v315 = vld [vmem:[%s270 + $0x78] sm:$0xff]
        %v316 = vld [vmem:[%s284] sm:$0xff]
        %v317 = vld [vmem:[%s284 + $0x8] sm:$0xff]
        %v318 = vld [vmem:[%s284 + $0x10] sm:$0xff]
        %v319 = vld [vmem:[%s284 + $0x18] sm:$0xff]
        %v320 = vld [vmem:[%s284 + $0x20] sm:$0xff]
        %v321 = vld [vmem:[%s284 + $0x28] sm:$0xff]
        %v322 = vld [vmem:[%s284 + $0x30] sm:$0xff]
        %v323 = vld [vmem:[%s284 + $0x38] sm:$0xff]
        %v324 = vld [vmem:[%s284 + $0x40] sm:$0xff]
        %v325 = vld [vmem:[%s284 + $0x48] sm:$0xff]
        %v326 = vld [vmem:[%s284 + $0x50] sm:$0xff]
        %v327 = vld [vmem:[%s284 + $0x58] sm:$0xff]
        %v328 = vld [vmem:[%s284 + $0x60] sm:$0xff]
        %v329 = vld [vmem:[%s284 + $0x68] sm:$0xff]
        %v330 = vld [vmem:[%s284 + $0x70] sm:$0xff]
        %v331 = vld [vmem:[%s284 + $0x78] sm:$0xff]
        %v332 = vld [vmem:[%s2] sm:$0xff]
        %v333 = vld [vmem:[%s2 + $0x8] sm:$0xff]
        %v334 = vld [vmem:[%s2 + $0x10] sm:$0xff]
        %v335 = vld [vmem:[%s2 + $0x18] sm:$0xff]
        %v336 = vld [vmem:[%s3] sm:$0x1]
        %vm337 = vcmask 261120
        %v339 = vsel %vm337, %v300, 0
        %v342 = vsel %vm337, %v301, 0
        %v345 = vsel %vm337, %v302, 0
        %v348 = vsel %vm337, %v303, 0
        %v351 = vsel %vm337, %v304, 0
        %v354 = vsel %vm337, %v305, 0
        %v357 = vsel %vm337, %v306, 0
        %v360 = vsel %vm337, %v307, 0
        %v363 = vsel %vm337, %v308, 0
        %v366 = vsel %vm337, %v309, 0
        %v369 = vsel %vm337, %v310, 0
        %v372 = vsel %vm337, %v311, 0
        %v375 = vsel %vm337, %v312, 0
        %v378 = vsel %vm337, %v313, 0
        %v381 = vsel %vm337, %v314, 0
        %v384 = vsel %vm337, %v315, 0
        %386 = vmatprep.subr.mxu0 0.0
        %387 = vmatpush1.msra.mxu0 %v332
        %388 = vmatprep.subr.mxu0 0.0
        %389 = vmatpush1.msra.mxu0 %v333
        %390 = vmatprep.subr.mxu0 0.0
        %391 = vmatpush1.msra.mxu0 %v334
        %392 = vmatprep.subr.mxu0 0.0
        %393 = vmatpush1.msra.mxu0 %v335
        %394 = vmatprep.subr.mxu0 0.0
        %395 = vmatpush1.msra.mxu0 0.0
        %396 = vmatprep.subr.mxu0 0.0
        %397 = vmatpush1.msra.mxu0 0.0
        %398 = vmatprep.subr.mxu0 0.0
        %399 = vmatpush1.msra.mxu0 0.0
        %400 = vmatprep.subr.mxu0 0.0
        %401 = vmatpush1.msra.mxu0 0.0
        %402 = vmatprep.subr.mxu0 0.0
        %403 = vmatpush1.msra.mxu0 0.0
        %404 = vmatprep.subr.mxu0 0.0
        %405 = vmatpush1.msra.mxu0 0.0
        %406 = vmatprep.subr.mxu0 0.0
        %407 = vmatpush1.msra.mxu0 0.0
        %408 = vmatprep.subr.mxu0 0.0
        %409 = vmatpush1.msra.mxu0 0.0
        %410 = vmatprep.subr.mxu0 0.0
        %411 = vmatpush1.msra.mxu0 0.0
        %412 = vmatprep.subr.mxu0 0.0
        %413 = vmatpush1.msra.mxu0 0.0
        %414 = vmatprep.subr.mxu0 0.0
        %415 = vmatpush1.msra.mxu0 0.0
        %416 = vmatprep.subr.mxu0 0.0
        %417 = vmatpush1.msra.mxu0 0.0
        %418 = vmatprep.subr.mxu0 0.0
        %419 = vmatpush1.msra.mxu0 0.0
        %420 = vmatprep.subr.mxu0 0.0
        %421 = vmatpush1.msra.mxu0 0.0
        %422 = vmatprep.subr.mxu0 0.0
        %423 = vmatpush1.msra.mxu0 0.0
        %424 = vmatprep.subr.mxu0 0.0
        %425 = vmatpush1.msra.mxu0 0.0
        %426 = vmatprep.subr.mxu0 0.0
        %427 = vmatpush1.msra.mxu0 0.0
        %428 = vmatprep.subr.mxu0 0.0
        %429 = vmatpush1.msra.mxu0 0.0
        %430 = vmatprep.subr.mxu0 0.0
        %431 = vmatpush1.msra.mxu0 0.0
        %432 = vmatprep.subr.mxu0 0.0
        %433 = vmatpush1.msra.mxu0 0.0
        %434 = vmatprep.subr.mxu0 0.0
        %435 = vmatpush1.msra.mxu0 0.0
        %436 = vmatprep.subr.mxu0 0.0
        %437 = vmatpush1.msra.mxu0 0.0
        %438 = vmatprep.subr.mxu0 0.0
        %439 = vmatpush1.msra.mxu0 0.0
        %440 = vmatprep.subr.mxu0 0.0
        %441 = vmatpush1.msra.mxu0 0.0
        %442 = vmatprep.subr.mxu0 0.0
        %443 = vmatpush1.msra.mxu0 0.0
        %444 = vmatprep.subr.mxu0 0.0
        %445 = vmatpush1.msra.mxu0 0.0
        %446 = vmatprep.subr.mxu0 0.0
        %447 = vmatpush1.msra.mxu0 0.0
        %448 = vmatprep.subr.mxu0 0.0
        %449 = vmatpush1.msra.mxu0 0.0
        %450 = vmatprep.mubr.f32.mxu0 0.0
        %451 = vmatmul.mubr.f32.gmra.mrb[0].mxu0 %v339
        %v452 = vpop.f32.mrb[0].mxu0
        %v453 = vadd.f32 0.0, %v452
        %v454 = vpop.f32.mrb[0].mxu0
        %455 = vmatprep.mubr.f32.mxu0 0.0
        %456 = vmatmul.mubr.f32.gmra.mrb[0].mxu0 %v342
        %v457 = vpop.f32.mrb[0].mxu0
        %v458 = vadd.f32 0.0, %v457
        %v459 = vpop.f32.mrb[0].mxu0
        %460 = vmatprep.mubr.f32.mxu0 0.0
        %461 = vmatmul.mubr.f32.gmra.mrb[0].mxu0 %v345
        %v462 = vpop.f32.mrb[0].mxu0
        %v463 = vadd.f32 0.0, %v462
        %v464 = vpop.f32.mrb[0].mxu0
        %465 = vmatprep.mubr.f32.mxu0 0.0
        %466 = vmatmul.mubr.f32.gmra.mrb[0].mxu0 %v348
        %v467 = vpop.f32.mrb[0].mxu0
        %v468 = vadd.f32 0.0, %v467
        %v469 = vpop.f32.mrb[0].mxu0
        %470 = vmatprep.mubr.f32.mxu0 0.0
        %471 = vmatmul.mubr.f32.gmra.mrb[0].mxu0 %v351
        %v472 = vpop.f32.mrb[0].mxu0
        %v473 = vadd.f32 0.0, %v472
        %v474 = vpop.f32.mrb[0].mxu0
        %475 = vmatprep.mubr.f32.mxu0 0.0
        %476 = vmatmul.mubr.f32.gmra.mrb[0].mxu0 %v354
        %v477 = vpop.f32.mrb[0].mxu0
        %v478 = vadd.f32 0.0, %v477
        %v479 = vpop.f32.mrb[0].mxu0
        %480 = vmatprep.mubr.f32.mxu0 0.0
        %481 = vmatmul.mubr.f32.gmra.mrb[0].mxu0 %v357
        %v482 = vpop.f32.mrb[0].mxu0
        %v483 = vadd.f32 0.0, %v482
        %v484 = vpop.f32.mrb[0].mxu0
        %485 = vmatprep.mubr.f32.mxu0 0.0
        %486 = vmatmul.mubr.f32.gmra.mrb[0].mxu0 %v360
        %v487 = vpop.f32.mrb[0].mxu0
        %v488 = vadd.f32 0.0, %v487
        %v489 = vpop.f32.mrb[0].mxu0
        %490 = vmatprep.mubr.f32.mxu0 0.0
        %491 = vmatmul.mubr.f32.gmra.mrb[0].mxu0 %v363
        %v492 = vpop.f32.mrb[0].mxu0
        %v493 = vadd.f32 0.0, %v492
        %v494 = vpop.f32.mrb[0].mxu0
        %495 = vmatprep.mubr.f32.mxu0 0.0
        %496 = vmatmul.mubr.f32.gmra.mrb[0].mxu0 %v366
        %v497 = vpop.f32.mrb[0].mxu0
        %v498 = vadd.f32 0.0, %v497
        %v499 = vpop.f32.mrb[0].mxu0
        %500 = vmatprep.mubr.f32.mxu0 0.0
        %501 = vmatmul.mubr.f32.gmra.mrb[0].mxu0 %v369
        %v502 = vpop.f32.mrb[0].mxu0
        %v503 = vadd.f32 0.0, %v502
        %v504 = vpop.f32.mrb[0].mxu0
        %505 = vmatprep.mubr.f32.mxu0 0.0
        %506 = vmatmul.mubr.f32.gmra.mrb[0].mxu0 %v372
        %v507 = vpop.f32.mrb[0].mxu0
        %v508 = vadd.f32 0.0, %v507
        %v509 = vpop.f32.mrb[0].mxu0
        %510 = vmatprep.mubr.f32.mxu0 0.0
        %511 = vmatmul.mubr.f32.gmra.mrb[0].mxu0 %v375
        %v512 = vpop.f32.mrb[0].mxu0
        %v513 = vadd.f32 0.0, %v512
        %v514 = vpop.f32.mrb[0].mxu0
        %515 = vmatprep.mubr.f32.mxu0 0.0
        %516 = vmatmul.mubr.f32.gmra.mrb[0].mxu0 %v378
        %v517 = vpop.f32.mrb[0].mxu0
        %v518 = vadd.f32 0.0, %v517
        %v519 = vpop.f32.mrb[0].mxu0
        %520 = vmatprep.mubr.f32.mxu0 0.0
        %521 = vmatmul.mubr.f32.gmra.mrb[0].mxu0 %v381
        %v522 = vpop.f32.mrb[0].mxu0
        %v523 = vadd.f32 0.0, %v522
        %v524 = vpop.f32.mrb[0].mxu0
        %525 = vmatprep.mubr.f32.mxu0 0.0
        %526 = vmatmul.mubr.f32.gmra.mrb[0].mxu0 %v384
        %v527 = vpop.f32.mrb[0].mxu0
        %v528 = vadd.f32 0.0, %v527
        %v529 = vpop.f32.mrb[0].mxu0
        %530 = vdwg.mxu0
        %v531 = vtanh.pop %v453
        %v532 = vtanh.pop %v458
        %v533 = vtanh.pop %v463
        %v534 = vtanh.pop %v468
        %v535 = vtanh.pop %v473
        %v536 = vtanh.pop %v478
        %v537 = vtanh.pop %v483
        %v538 = vtanh.pop %v488
        %v539 = vtanh.pop %v493
        %v540 = vtanh.pop %v498
        %v541 = vtanh.pop %v503
        %v542 = vtanh.pop %v508
        %v543 = vtanh.pop %v513
        %v544 = vtanh.pop %v518
        %v545 = vtanh.pop %v523
        %v546 = vtanh.pop %v528
        %v548 = vsel %vm337, %v316, 0
        %v551 = vsel %vm337, %v317, 0
        %v554 = vsel %vm337, %v318, 0
        %v557 = vsel %vm337, %v319, 0
        %v560 = vsel %vm337, %v320, 0
        %v563 = vsel %vm337, %v321, 0
        %v566 = vsel %vm337, %v322, 0
        %v569 = vsel %vm337, %v323, 0
        %v572 = vsel %vm337, %v324, 0
        %v575 = vsel %vm337, %v325, 0
        %v578 = vsel %vm337, %v326, 0
        %v581 = vsel %vm337, %v327, 0
        %v584 = vsel %vm337, %v328, 0
        %v587 = vsel %vm337, %v329, 0
        %v590 = vsel %vm337, %v330, 0
        %v593 = vsel %vm337, %v331, 0
        %595 = vmatprep.subr.mxu0 0.0
        %596 = vmatpush1.msra.mxu0 %v332
        %597 = vmatprep.subr.mxu0 0.0
        %598 = vmatpush1.msra.mxu0 %v333
        %599 = vmatprep.subr.mxu0 0.0
        %600 = vmatpush1.msra.mxu0 %v334
        %601 = vmatprep.subr.mxu0 0.0
        %602 = vmatpush1.msra.mxu0 %v335
        %603 = vmatprep.subr.mxu0 0.0
        %604 = vmatpush1.msra.mxu0 0.0
        %605 = vmatprep.subr.mxu0 0.0
        %606 = vmatpush1.msra.mxu0 0.0
        %607 = vmatprep.subr.mxu0 0.0
        %608 = vmatpush1.msra.mxu0 0.0
        %609 = vmatprep.subr.mxu0 0.0
        %610 = vmatpush1.msra.mxu0 0.0
        %611 = vmatprep.subr.mxu0 0.0
        %612 = vmatpush1.msra.mxu0 0.0
        %613 = vmatprep.subr.mxu0 0.0
        %614 = vmatpush1.msra.mxu0 0.0
        %615 = vmatprep.subr.mxu0 0.0
        %616 = vmatpush1.msra.mxu0 0.0
        %617 = vmatprep.subr.mxu0 0.0
        %618 = vmatpush1.msra.mxu0 0.0
        %619 = vmatprep.subr.mxu0 0.0
        %620 = vmatpush1.msra.mxu0 0.0
        %621 = vmatprep.subr.mxu0 0.0
        %622 = vmatpush1.msra.mxu0 0.0
        %623 = vmatprep.subr.mxu0 0.0
        %624 = vmatpush1.msra.mxu0 0.0
        %625 = vmatprep.subr.mxu0 0.0
        %626 = vmatpush1.msra.mxu0 0.0
        %627 = vmatprep.subr.mxu0 0.0
        %628 = vmatpush1.msra.mxu0 0.0
        %629 = vmatprep.subr.mxu0 0.0
        %630 = vmatpush1.msra.mxu0 0.0
        %631 = vmatprep.subr.mxu0 0.0
        %632 = vmatpush1.msra.mxu0 0.0
        %633 = vmatprep.subr.mxu0 0.0
        %634 = vmatpush1.msra.mxu0 0.0
        %635 = vmatprep.subr.mxu0 0.0
        %636 = vmatpush1.msra.mxu0 0.0
        %637 = vmatprep.subr.mxu0 0.0
        %638 = vmatpush1.msra.mxu0 0.0
        %639 = vmatprep.subr.mxu0 0.0
        %640 = vmatpush1.msra.mxu0 0.0
        %641 = vmatprep.subr.mxu0 0.0
        %642 = vmatpush1.msra.mxu0 0.0
        %643 = vmatprep.subr.mxu0 0.0
        %644 = vmatpush1.msra.mxu0 0.0
        %645 = vmatprep.subr.mxu0 0.0
        %646 = vmatpush1.msra.mxu0 0.0
        %647 = vmatprep.subr.mxu0 0.0
        %648 = vmatpush1.msra.mxu0 0.0
        %649 = vmatprep.subr.mxu0 0.0
        %650 = vmatpush1.msra.mxu0 0.0
        %651 = vmatprep.subr.mxu0 0.0
        %652 = vmatpush1.msra.mxu0 0.0
        %653 = vmatprep.subr.mxu0 0.0
        %654 = vmatpush1.msra.mxu0 0.0
        %655 = vmatprep.subr.mxu0 0.0
        %656 = vmatpush1.msra.mxu0 0.0
        %657 = vmatprep.subr.mxu0 0.0
        %658 = vmatpush1.msra.mxu0 0.0
        %659 = vmatprep.mubr.f32.mxu0 0.0
        %660 = vmatmul.mubr.f32.gmra.mrb[0].mxu0 %v548
        %v661 = vpop.f32.mrb[0].mxu0
        %v662 = vadd.f32 0.0, %v661
        %v663 = vpop.f32.mrb[0].mxu0
        %664 = vmatprep.mubr.f32.mxu0 0.0
        %665 = vmatmul.mubr.f32.gmra.mrb[0].mxu0 %v551
        %v666 = vpop.f32.mrb[0].mxu0
        %v667 = vadd.f32 0.0, %v666
        %v668 = vpop.f32.mrb[0].mxu0
        %669 = vmatprep.mubr.f32.mxu0 0.0
        %670 = vmatmul.mubr.f32.gmra.mrb[0].mxu0 %v554
        %v671 = vpop.f32.mrb[0].mxu0
        %v672 = vadd.f32 0.0, %v671
        %v673 = vpop.f32.mrb[0].mxu0
        %674 = vmatprep.mubr.f32.mxu0 0.0
        %675 = vmatmul.mubr.f32.gmra.mrb[0].mxu0 %v557
        %v676 = vpop.f32.mrb[0].mxu0
        %v677 = vadd.f32 0.0, %v676
        %v678 = vpop.f32.mrb[0].mxu0
        %679 = vmatprep.mubr.f32.mxu0 0.0
        %680 = vmatmul.mubr.f32.gmra.mrb[0].mxu0 %v560
        %v681 = vpop.f32.mrb[0].mxu0
        %v682 = vadd.f32 0.0, %v681
        %v683 = vpop.f32.mrb[0].mxu0
        %684 = vmatprep.mubr.f32.mxu0 0.0
        %685 = vmatmul.mubr.f32.gmra.mrb[0].mxu0 %v563
        %v686 = vpop.f32.mrb[0].mxu0
        %v687 = vadd.f32 0.0, %v686
        %v688 = vpop.f32.mrb[0].mxu0
        %689 = vmatprep.mubr.f32.mxu0 0.0
        %690 = vmatmul.mubr.f32.gmra.mrb[0].mxu0 %v566
        %v691 = vpop.f32.mrb[0].mxu0
        %v692 = vadd.f32 0.0, %v691
        %v693 = vpop.f32.mrb[0].mxu0
        %694 = vmatprep.mubr.f32.mxu0 0.0
        %695 = vmatmul.mubr.f32.gmra.mrb[0].mxu0 %v569
        %v696 = vpop.f32.mrb[0].mxu0
        %v697 = vadd.f32 0.0, %v696
        %v698 = vpop.f32.mrb[0].mxu0
        %699 = vmatprep.mubr.f32.mxu0 0.0
        %700 = vmatmul.mubr.f32.gmra.mrb[0].mxu0 %v572
        %v701 = vpop.f32.mrb[0].mxu0
        %v702 = vadd.f32 0.0, %v701
        %v703 = vpop.f32.mrb[0].mxu0
        %704 = vmatprep.mubr.f32.mxu0 0.0
        %705 = vmatmul.mubr.f32.gmra.mrb[0].mxu0 %v575
        %v706 = vpop.f32.mrb[0].mxu0
        %v707 = vadd.f32 0.0, %v706
        %v708 = vpop.f32.mrb[0].mxu0
        %709 = vmatprep.mubr.f32.mxu0 0.0
        %710 = vmatmul.mubr.f32.gmra.mrb[0].mxu0 %v578
        %v711 = vpop.f32.mrb[0].mxu0
        %v712 = vadd.f32 0.0, %v711
        %v713 = vpop.f32.mrb[0].mxu0
        %714 = vmatprep.mubr.f32.mxu0 0.0
        %715 = vmatmul.mubr.f32.gmra.mrb[0].mxu0 %v581
        %v716 = vpop.f32.mrb[0].mxu0
        %v717 = vadd.f32 0.0, %v716
        %v718 = vpop.f32.mrb[0].mxu0
        %719 = vmatprep.mubr.f32.mxu0 0.0
        %720 = vmatmul.mubr.f32.gmra.mrb[0].mxu0 %v584
        %v721 = vpop.f32.mrb[0].mxu0
        %v722 = vadd.f32 0.0, %v721
        %v723 = vpop.f32.mrb[0].mxu0
        %724 = vmatprep.mubr.f32.mxu0 0.0
        %725 = vmatmul.mubr.f32.gmra.mrb[0].mxu0 %v587
        %v726 = vpop.f32.mrb[0].mxu0
        %v727 = vadd.f32 0.0, %v726
        %v728 = vpop.f32.mrb[0].mxu0
        %729 = vmatprep.mubr.f32.mxu0 0.0
        %730 = vmatmul.mubr.f32.gmra.mrb[0].mxu0 %v590
        %v731 = vpop.f32.mrb[0].mxu0
        %v732 = vadd.f32 0.0, %v731
        %v733 = vpop.f32.mrb[0].mxu0
        %734 = vmatprep.mubr.f32.mxu0 0.0
        %735 = vmatmul.mubr.f32.gmra.mrb[0].mxu0 %v593
        %v736 = vpop.f32.mrb[0].mxu0
        %v737 = vadd.f32 0.0, %v736
        %v738 = vpop.f32.mrb[0].mxu0
        %739 = vdwg.mxu0
        %v740 = vtanh.pop %v662
        %v741 = vtanh.pop %v667
        %v742 = vtanh.pop %v672
        %v743 = vtanh.pop %v677
        %v744 = vtanh.pop %v682
        %v745 = vtanh.pop %v687
        %v746 = vtanh.pop %v692
        %v747 = vtanh.pop %v697
        %v748 = vtanh.pop %v702
        %v749 = vtanh.pop %v707
        %v750 = vtanh.pop %v712
        %v751 = vtanh.pop %v717
        %v752 = vtanh.pop %v722
        %v753 = vtanh.pop %v727
        %v754 = vtanh.pop %v732
        %v755 = vtanh.pop %v737
        %v757 = vlaneseq
        %v758 = vshrl.u32 %v757, 7
        %v759 = vsub.s32 0, %v758
        %v760 = vrot.slane %v336, %v759
        %v762 = vmul.f32 %v531, %v760
        %v763 = vmul.f32 %v532, %v760
        %v764 = vmul.f32 %v533, %v760
        %v765 = vmul.f32 %v534, %v760
        %v766 = vmul.f32 %v535, %v760
        %v767 = vmul.f32 %v536, %v760
        %v768 = vmul.f32 %v537, %v760
        %v769 = vmul.f32 %v538, %v760
        %v770 = vmul.f32 %v539, %v760
        %v771 = vmul.f32 %v540, %v760
        %v772 = vmul.f32 %v541, %v760
        %v773 = vmul.f32 %v542, %v760
        %v774 = vmul.f32 %v543, %v760
        %v775 = vmul.f32 %v544, %v760
        %v776 = vmul.f32 %v545, %v760
        %v777 = vmul.f32 %v546, %v760
        %vm778 = vcmask 130048
        %v779 = vsel %vm778, %v762, 0.0
        %780 = vadd.xlane.f32.xlu0 %v779
        %v781 = vpop.xlane.xlu0 %780
        %v782 = vsel %vm778, %v763, 0.0
        %783 = vadd.xlane.f32.xlu0 %v782
        %v784 = vpop.xlane.xlu0 %783
        %v785 = vsel %vm778, %v764, 0.0
        %786 = vadd.xlane.f32.xlu0 %v785
        %v787 = vpop.xlane.xlu0 %786
        %v788 = vsel %vm778, %v765, 0.0
        %789 = vadd.xlane.f32.xlu0 %v788
        %v790 = vpop.xlane.xlu0 %789
        %v791 = vsel %vm778, %v766, 0.0
        %792 = vadd.xlane.f32.xlu0 %v791
        %v793 = vpop.xlane.xlu0 %792
        %v794 = vsel %vm778, %v767, 0.0
        %795 = vadd.xlane.f32.xlu0 %v794
        %v796 = vpop.xlane.xlu0 %795
        %v797 = vsel %vm778, %v768, 0.0
        %798 = vadd.xlane.f32.xlu0 %v797
        %v799 = vpop.xlane.xlu0 %798
        %v800 = vsel %vm778, %v769, 0.0
        %801 = vadd.xlane.f32.xlu0 %v800
        %v802 = vpop.xlane.xlu0 %801
        %v803 = vsel %vm778, %v770, 0.0
        %804 = vadd.xlane.f32.xlu0 %v803
        %v805 = vpop.xlane.xlu0 %804
        %v806 = vsel %vm778, %v771, 0.0
        %807 = vadd.xlane.f32.xlu0 %v806
        %v808 = vpop.xlane.xlu0 %807
        %v809 = vsel %vm778, %v772, 0.0
        %810 = vadd.xlane.f32.xlu0 %v809
        %v811 = vpop.xlane.xlu0 %810
        %v812 = vsel %vm778, %v773, 0.0
        %813 = vadd.xlane.f32.xlu0 %v812
        %v814 = vpop.xlane.xlu0 %813
        %v815 = vsel %vm778, %v774, 0.0
        %816 = vadd.xlane.f32.xlu0 %v815
        %v817 = vpop.xlane.xlu0 %816
        %v818 = vsel %vm778, %v775, 0.0
        %819 = vadd.xlane.f32.xlu0 %v818
        %v820 = vpop.xlane.xlu0 %819
        %v821 = vsel %vm778, %v776, 0.0
        %822 = vadd.xlane.f32.xlu0 %v821
        %v823 = vpop.xlane.xlu0 %822
        %v824 = vsel %vm778, %v777, 0.0
        %825 = vadd.xlane.f32.xlu0 %v824
        %v826 = vpop.xlane.xlu0 %825
        %v827 = vadd.f32 %v781, 1e-06
        %v828 = vadd.f32 %v784, 1e-06
        %v829 = vadd.f32 %v787, 1e-06
        %v830 = vadd.f32 %v790, 1e-06
        %v831 = vadd.f32 %v793, 1e-06
        %v832 = vadd.f32 %v796, 1e-06
        %v833 = vadd.f32 %v799, 1e-06
        %v834 = vadd.f32 %v802, 1e-06
        %v835 = vadd.f32 %v805, 1e-06
        %v836 = vadd.f32 %v808, 1e-06
        %v837 = vadd.f32 %v811, 1e-06
        %v838 = vadd.f32 %v814, 1e-06
        %v839 = vadd.f32 %v817, 1e-06
        %v840 = vadd.f32 %v820, 1e-06
        %v841 = vadd.f32 %v823, 1e-06
        %v842 = vadd.f32 %v826, 1e-06
        %v843 = vmul.f32 %v740, %v760
        %v844 = vmul.f32 %v741, %v760
        %v845 = vmul.f32 %v742, %v760
        %v846 = vmul.f32 %v743, %v760
        %v847 = vmul.f32 %v744, %v760
        %v848 = vmul.f32 %v745, %v760
        %v849 = vmul.f32 %v746, %v760
        %v850 = vmul.f32 %v747, %v760
        %v851 = vmul.f32 %v748, %v760
        %v852 = vmul.f32 %v749, %v760
        %v853 = vmul.f32 %v750, %v760
        %v854 = vmul.f32 %v751, %v760
        %v855 = vmul.f32 %v752, %v760
        %v856 = vmul.f32 %v753, %v760
        %v857 = vmul.f32 %v754, %v760
        %v858 = vmul.f32 %v755, %v760
        %v859 = vsel %vm778, %v843, 0.0
        %860 = vadd.xlane.f32.xlu0 %v859
        %v861 = vpop.xlane.xlu0 %860
        %v862 = vsel %vm778, %v844, 0.0
        %863 = vadd.xlane.f32.xlu0 %v862
        %v864 = vpop.xlane.xlu0 %863
        %v865 = vsel %vm778, %v845, 0.0
        %866 = vadd.xlane.f32.xlu0 %v865
        %v867 = vpop.xlane.xlu0 %866
        %v868 = vsel %vm778, %v846, 0.0
        %869 = vadd.xlane.f32.xlu0 %v868
        %v870 = vpop.xlane.xlu0 %869
        %v871 = vsel %vm778, %v847, 0.0
        %872 = vadd.xlane.f32.xlu0 %v871
        %v873 = vpop.xlane.xlu0 %872
        %v874 = vsel %vm778, %v848, 0.0
        %875 = vadd.xlane.f32.xlu0 %v874
        %v876 = vpop.xlane.xlu0 %875
        %v877 = vsel %vm778, %v849, 0.0
        %878 = vadd.xlane.f32.xlu0 %v877
        %v879 = vpop.xlane.xlu0 %878
        %v880 = vsel %vm778, %v850, 0.0
        %881 = vadd.xlane.f32.xlu0 %v880
        %v882 = vpop.xlane.xlu0 %881
        %v883 = vsel %vm778, %v851, 0.0
        %884 = vadd.xlane.f32.xlu0 %v883
        %v885 = vpop.xlane.xlu0 %884
        %v886 = vsel %vm778, %v852, 0.0
        %887 = vadd.xlane.f32.xlu0 %v886
        %v888 = vpop.xlane.xlu0 %887
        %v889 = vsel %vm778, %v853, 0.0
        %890 = vadd.xlane.f32.xlu0 %v889
        %v891 = vpop.xlane.xlu0 %890
        %v892 = vsel %vm778, %v854, 0.0
        %893 = vadd.xlane.f32.xlu0 %v892
        %v894 = vpop.xlane.xlu0 %893
        %v895 = vsel %vm778, %v855, 0.0
        %896 = vadd.xlane.f32.xlu0 %v895
        %v897 = vpop.xlane.xlu0 %896
        %v898 = vsel %vm778, %v856, 0.0
        %899 = vadd.xlane.f32.xlu0 %v898
        %v900 = vpop.xlane.xlu0 %899
        %v901 = vsel %vm778, %v857, 0.0
        %902 = vadd.xlane.f32.xlu0 %v901
        %v903 = vpop.xlane.xlu0 %902
        %v904 = vsel %vm778, %v858, 0.0
        %905 = vadd.xlane.f32.xlu0 %v904
        %v906 = vpop.xlane.xlu0 %905
        %v907 = vadd.f32 %v861, 1e-06
        %v908 = vadd.f32 %v864, 1e-06
        %v909 = vadd.f32 %v867, 1e-06
        %v910 = vadd.f32 %v870, 1e-06
        %v911 = vadd.f32 %v873, 1e-06
        %v912 = vadd.f32 %v876, 1e-06
        %v913 = vadd.f32 %v879, 1e-06
        %v914 = vadd.f32 %v882, 1e-06
        %v915 = vadd.f32 %v885, 1e-06
        %v916 = vadd.f32 %v888, 1e-06
        %v917 = vadd.f32 %v891, 1e-06
        %v918 = vadd.f32 %v894, 1e-06
        %v919 = vadd.f32 %v897, 1e-06
        %v920 = vadd.f32 %v900, 1e-06
        %v921 = vadd.f32 %v903, 1e-06
        %v922 = vadd.f32 %v906, 1e-06
        %v923 = vmax.f32 %v827, %v907
        %v924 = vmax.f32 %v828, %v908
        %v925 = vmax.f32 %v829, %v909
        %v926 = vmax.f32 %v830, %v910
        %v927 = vmax.f32 %v831, %v911
        %v928 = vmax.f32 %v832, %v912
        %v929 = vmax.f32 %v833, %v913
        %v930 = vmax.f32 %v834, %v914
        %v931 = vmax.f32 %v835, %v915
        %v932 = vmax.f32 %v836, %v916
        %v933 = vmax.f32 %v837, %v917
        %v934 = vmax.f32 %v838, %v918
        %v935 = vmax.f32 %v839, %v919
        %v936 = vmax.f32 %v840, %v920
        %v937 = vmax.f32 %v841, %v921
        %v938 = vmax.f32 %v842, %v922
        %v939 = vsub.f32 %v827, %v923
        %v940 = vsub.f32 %v828, %v924
        %v941 = vsub.f32 %v829, %v925
        %v942 = vsub.f32 %v830, %v926
        %v943 = vsub.f32 %v831, %v927
        %v944 = vsub.f32 %v832, %v928
        %v945 = vsub.f32 %v833, %v929
        %v946 = vsub.f32 %v834, %v930
        %v947 = vsub.f32 %v835, %v931
        %v948 = vsub.f32 %v836, %v932
        %v949 = vsub.f32 %v837, %v933
        %v950 = vsub.f32 %v838, %v934
        %v951 = vsub.f32 %v839, %v935
        %v952 = vsub.f32 %v840, %v936
        %v953 = vsub.f32 %v841, %v937
        %v954 = vsub.f32 %v842, %v938
        %v955 = vmul.f32 %v939, 1.442695
        %v956 = vpow.pop %v955
        %v957 = vmul.f32 %v940, 1.442695
        %v958 = vpow.pop %v957
        %v959 = vmul.f32 %v941, 1.442695
        %v960 = vpow.pop %v959
        %v961 = vmul.f32 %v942, 1.442695
        %v962 = vpow.pop %v961
        %v963 = vmul.f32 %v943, 1.442695
        %v964 = vpow.pop %v963
        %v965 = vmul.f32 %v944, 1.442695
        %v966 = vpow.pop %v965
        %v967 = vmul.f32 %v945, 1.442695
        %v968 = vpow.pop %v967
        %v969 = vmul.f32 %v946, 1.442695
        %v970 = vpow.pop %v969
        %v971 = vmul.f32 %v947, 1.442695
        %v972 = vpow.pop %v971
        %v973 = vmul.f32 %v948, 1.442695
        %v974 = vpow.pop %v973
        %v975 = vmul.f32 %v949, 1.442695
        %v976 = vpow.pop %v975
        %v977 = vmul.f32 %v950, 1.442695
        %v978 = vpow.pop %v977
        %v979 = vmul.f32 %v951, 1.442695
        %v980 = vpow.pop %v979
        %v981 = vmul.f32 %v952, 1.442695
        %v982 = vpow.pop %v981
        %v983 = vmul.f32 %v953, 1.442695
        %v984 = vpow.pop %v983
        %v985 = vmul.f32 %v954, 1.442695
        %v986 = vpow.pop %v985
        %v987 = vsub.f32 %v907, %v923
        %v988 = vsub.f32 %v908, %v924
        %v989 = vsub.f32 %v909, %v925
        %v990 = vsub.f32 %v910, %v926
        %v991 = vsub.f32 %v911, %v927
        %v992 = vsub.f32 %v912, %v928
        %v993 = vsub.f32 %v913, %v929
        %v994 = vsub.f32 %v914, %v930
        %v995 = vsub.f32 %v915, %v931
        %v996 = vsub.f32 %v916, %v932
        %v997 = vsub.f32 %v917, %v933
        %v998 = vsub.f32 %v918, %v934
        %v999 = vsub.f32 %v919, %v935
        %v1000 = vsub.f32 %v920, %v936
        %v1001 = vsub.f32 %v921, %v937
        %v1002 = vsub.f32 %v922, %v938
        %v1003 = vmul.f32 %v987, 1.442695
        %v1004 = vpow.pop %v1003
        %v1005 = vmul.f32 %v988, 1.442695
        %v1006 = vpow.pop %v1005
        %v1007 = vmul.f32 %v989, 1.442695
        %v1008 = vpow.pop %v1007
        %v1009 = vmul.f32 %v990, 1.442695
        %v1010 = vpow.pop %v1009
        %v1011 = vmul.f32 %v991, 1.442695
        %v1012 = vpow.pop %v1011
        %v1013 = vmul.f32 %v992, 1.442695
        %v1014 = vpow.pop %v1013
        %v1015 = vmul.f32 %v993, 1.442695
        %v1016 = vpow.pop %v1015
        %v1017 = vmul.f32 %v994, 1.442695
        %v1018 = vpow.pop %v1017
        %v1019 = vmul.f32 %v995, 1.442695
        %v1020 = vpow.pop %v1019
        %v1021 = vmul.f32 %v996, 1.442695
        %v1022 = vpow.pop %v1021
        %v1023 = vmul.f32 %v997, 1.442695
        %v1024 = vpow.pop %v1023
        %v1025 = vmul.f32 %v998, 1.442695
        %v1026 = vpow.pop %v1025
        %v1027 = vmul.f32 %v999, 1.442695
        %v1028 = vpow.pop %v1027
        %v1029 = vmul.f32 %v1000, 1.442695
        %v1030 = vpow.pop %v1029
        %v1031 = vmul.f32 %v1001, 1.442695
        %v1032 = vpow.pop %v1031
        %v1033 = vmul.f32 %v1002, 1.442695
        %v1034 = vpow.pop %v1033
        %v1035 = vadd.f32 %v956, %v1004
        %v1036 = vadd.f32 %v958, %v1006
        %v1037 = vadd.f32 %v960, %v1008
        %v1038 = vadd.f32 %v962, %v1010
        %v1039 = vadd.f32 %v964, %v1012
        %v1040 = vadd.f32 %v966, %v1014
        %v1041 = vadd.f32 %v968, %v1016
        %v1042 = vadd.f32 %v970, %v1018
        %v1043 = vadd.f32 %v972, %v1020
        %v1044 = vadd.f32 %v974, %v1022
        %v1045 = vadd.f32 %v976, %v1024
        %v1046 = vadd.f32 %v978, %v1026
        %v1047 = vadd.f32 %v980, %v1028
        %v1048 = vadd.f32 %v982, %v1030
        %v1049 = vadd.f32 %v984, %v1032
        %v1050 = vadd.f32 %v986, %v1034
        %v1051 = vrcp.pop %v1035
        %v1052 = vrcp.pop %v1036
        %v1053 = vrcp.pop %v1037
        %v1054 = vrcp.pop %v1038
        %v1055 = vrcp.pop %v1039
        %v1056 = vrcp.pop %v1040
        %v1057 = vrcp.pop %v1041
        %v1058 = vrcp.pop %v1042
        %v1059 = vrcp.pop %v1043
        %v1060 = vrcp.pop %v1044
        %v1061 = vrcp.pop %v1045
        %v1062 = vrcp.pop %v1046
        %v1063 = vrcp.pop %v1047
        %v1064 = vrcp.pop %v1048
        %v1065 = vrcp.pop %v1049
        %v1066 = vrcp.pop %v1050
        %v1067 = vmul.f32 %v1035, %v1051
        %v1068 = vmul.f32 %v1036, %v1052
        %v1069 = vmul.f32 %v1037, %v1053
        %v1070 = vmul.f32 %v1038, %v1054
        %v1071 = vmul.f32 %v1039, %v1055
        %v1072 = vmul.f32 %v1040, %v1056
        %v1073 = vmul.f32 %v1041, %v1057
        %v1074 = vmul.f32 %v1042, %v1058
        %v1075 = vmul.f32 %v1043, %v1059
        %v1076 = vmul.f32 %v1044, %v1060
        %v1077 = vmul.f32 %v1045, %v1061
        %v1078 = vmul.f32 %v1046, %v1062
        %v1079 = vmul.f32 %v1047, %v1063
        %v1080 = vmul.f32 %v1048, %v1064
        %v1081 = vmul.f32 %v1049, %v1065
        %v1082 = vmul.f32 %v1050, %v1066
        %v1083 = vsub.f32 2.0, %v1067
        %v1084 = vsub.f32 2.0, %v1068
        %v1085 = vsub.f32 2.0, %v1069
        %v1086 = vsub.f32 2.0, %v1070
        %v1087 = vsub.f32 2.0, %v1071
        %v1088 = vsub.f32 2.0, %v1072
        %v1089 = vsub.f32 2.0, %v1073
        %v1090 = vsub.f32 2.0, %v1074
        %v1091 = vsub.f32 2.0, %v1075
        %v1092 = vsub.f32 2.0, %v1076
        %v1093 = vsub.f32 2.0, %v1077
        %v1094 = vsub.f32 2.0, %v1078
        %v1095 = vsub.f32 2.0, %v1079
        %v1096 = vsub.f32 2.0, %v1080
        %v1097 = vsub.f32 2.0, %v1081
        %v1098 = vsub.f32 2.0, %v1082
        %v1099 = vmul.f32 %v1051, %v1083
        %v1100 = vmul.f32 %v1052, %v1084
        %v1101 = vmul.f32 %v1053, %v1085
        %v1102 = vmul.f32 %v1054, %v1086
        %v1103 = vmul.f32 %v1055, %v1087
        %v1104 = vmul.f32 %v1056, %v1088
        %v1105 = vmul.f32 %v1057, %v1089
        %v1106 = vmul.f32 %v1058, %v1090
        %v1107 = vmul.f32 %v1059, %v1091
        %v1108 = vmul.f32 %v1060, %v1092
        %v1109 = vmul.f32 %v1061, %v1093
        %v1110 = vmul.f32 %v1062, %v1094
        %v1111 = vmul.f32 %v1063, %v1095
        %v1112 = vmul.f32 %v1064, %v1096
        %v1113 = vmul.f32 %v1065, %v1097
        %v1114 = vmul.f32 %v1066, %v1098
        %v1115 = vmul.f32 %v956, %v1099
        %v1116 = vmul.f32 %v958, %v1100
        %v1117 = vmul.f32 %v960, %v1101
        %v1118 = vmul.f32 %v962, %v1102
        %v1119 = vmul.f32 %v964, %v1103
        %v1120 = vmul.f32 %v966, %v1104
        %v1121 = vmul.f32 %v968, %v1105
        %v1122 = vmul.f32 %v970, %v1106
        %v1123 = vmul.f32 %v972, %v1107
        %v1124 = vmul.f32 %v974, %v1108
        %v1125 = vmul.f32 %v976, %v1109
        %v1126 = vmul.f32 %v978, %v1110
        %v1127 = vmul.f32 %v980, %v1111
        %v1128 = vmul.f32 %v982, %v1112
        %v1129 = vmul.f32 %v984, %v1113
        %v1130 = vmul.f32 %v986, %v1114
        %v1131 = vmul.f32 %v1004, %v1099
        %v1132 = vmul.f32 %v1006, %v1100
        %v1133 = vmul.f32 %v1008, %v1101
        %v1134 = vmul.f32 %v1010, %v1102
        %v1135 = vmul.f32 %v1012, %v1103
        %v1136 = vmul.f32 %v1014, %v1104
        %v1137 = vmul.f32 %v1016, %v1105
        %v1138 = vmul.f32 %v1018, %v1106
        %v1139 = vmul.f32 %v1020, %v1107
        %v1140 = vmul.f32 %v1022, %v1108
        %v1141 = vmul.f32 %v1024, %v1109
        %v1142 = vmul.f32 %v1026, %v1110
        %v1143 = vmul.f32 %v1028, %v1111
        %v1144 = vmul.f32 %v1030, %v1112
        %v1145 = vmul.f32 %v1032, %v1113
        %v1146 = vmul.f32 %v1034, %v1114
        %v1147 = vmul.f32 %v1115, %v300
        %v1148 = vmul.f32 %v1116, %v301
        %v1149 = vmul.f32 %v1117, %v302
        %v1150 = vmul.f32 %v1118, %v303
        %v1151 = vmul.f32 %v1119, %v304
        %v1152 = vmul.f32 %v1120, %v305
        %v1153 = vmul.f32 %v1121, %v306
        %v1154 = vmul.f32 %v1122, %v307
        %v1155 = vmul.f32 %v1123, %v308
        %v1156 = vmul.f32 %v1124, %v309
        %v1157 = vmul.f32 %v1125, %v310
        %v1158 = vmul.f32 %v1126, %v311
        %v1159 = vmul.f32 %v1127, %v312
        %v1160 = vmul.f32 %v1128, %v313
        %v1161 = vmul.f32 %v1129, %v314
        %v1162 = vmul.f32 %v1130, %v315
        %v1163 = vmul.f32 %v1131, %v316
        %v1164 = vmul.f32 %v1132, %v317
        %v1165 = vmul.f32 %v1133, %v318
        %v1166 = vmul.f32 %v1134, %v319
        %v1167 = vmul.f32 %v1135, %v320
        %v1168 = vmul.f32 %v1136, %v321
        %v1169 = vmul.f32 %v1137, %v322
        %v1170 = vmul.f32 %v1138, %v323
        %v1171 = vmul.f32 %v1139, %v324
        %v1172 = vmul.f32 %v1140, %v325
        %v1173 = vmul.f32 %v1141, %v326
        %v1174 = vmul.f32 %v1142, %v327
        %v1175 = vmul.f32 %v1143, %v328
        %v1176 = vmul.f32 %v1144, %v329
        %v1177 = vmul.f32 %v1145, %v330
        %v1178 = vmul.f32 %v1146, %v331
        %v1179 = vadd.f32 %v1147, %v1163
        %v1180 = vadd.f32 %v1148, %v1164
        %v1181 = vadd.f32 %v1149, %v1165
        %v1182 = vadd.f32 %v1150, %v1166
        %v1183 = vadd.f32 %v1151, %v1167
        %v1184 = vadd.f32 %v1152, %v1168
        %v1185 = vadd.f32 %v1153, %v1169
        %v1186 = vadd.f32 %v1154, %v1170
        %v1187 = vadd.f32 %v1155, %v1171
        %v1188 = vadd.f32 %v1156, %v1172
        %v1189 = vadd.f32 %v1157, %v1173
        %v1190 = vadd.f32 %v1158, %v1174
        %v1191 = vadd.f32 %v1159, %v1175
        %v1192 = vadd.f32 %v1160, %v1176
        %v1193 = vadd.f32 %v1161, %v1177
        %v1194 = vadd.f32 %v1162, %v1178
        %1195 = vst.msk [vmem:[%s255] sm:$0xff] %vm337, %v1179
        %1196 = vst.msk [vmem:[%s255 + $0x8] sm:$0xff] %vm337, %v1180
        %1197 = vst.msk [vmem:[%s255 + $0x10] sm:$0xff] %vm337, %v1181
        %1198 = vst.msk [vmem:[%s255 + $0x18] sm:$0xff] %vm337, %v1182
        %1199 = vst.msk [vmem:[%s255 + $0x20] sm:$0xff] %vm337, %v1183
        %1200 = vst.msk [vmem:[%s255 + $0x28] sm:$0xff] %vm337, %v1184
        %1201 = vst.msk [vmem:[%s255 + $0x30] sm:$0xff] %vm337, %v1185
        %1202 = vst.msk [vmem:[%s255 + $0x38] sm:$0xff] %vm337, %v1186
        %1203 = vst.msk [vmem:[%s255 + $0x40] sm:$0xff] %vm337, %v1187
        %1204 = vst.msk [vmem:[%s255 + $0x48] sm:$0xff] %vm337, %v1188
        %1205 = vst.msk [vmem:[%s255 + $0x50] sm:$0xff] %vm337, %v1189
        %1206 = vst.msk [vmem:[%s255 + $0x58] sm:$0xff] %vm337, %v1190
        %1207 = vst.msk [vmem:[%s255 + $0x60] sm:$0xff] %vm337, %v1191
        %1208 = vst.msk [vmem:[%s255 + $0x68] sm:$0xff] %vm337, %v1192
        %1209 = vst.msk [vmem:[%s255 + $0x70] sm:$0xff] %vm337, %v1193
        %1210 = vst.msk [vmem:[%s255 + $0x78] sm:$0xff] %vm337, %v1194
        %vm1211 = vcmask 7168
        %v1212 = vsel %vm1211, %v1115, %v1131
        %v1213 = vsel %vm1211, %v1116, %v1132
        %v1214 = vsel %vm1211, %v1117, %v1133
        %v1215 = vsel %vm1211, %v1118, %v1134
        %v1216 = vsel %vm1211, %v1119, %v1135
        %v1217 = vsel %vm1211, %v1120, %v1136
        %v1218 = vsel %vm1211, %v1121, %v1137
        %v1219 = vsel %vm1211, %v1122, %v1138
        %v1220 = vsel %vm1211, %v1123, %v1139
        %v1221 = vsel %vm1211, %v1124, %v1140
        %v1222 = vsel %vm1211, %v1125, %v1141
        %v1223 = vsel %vm1211, %v1126, %v1142
        %v1224 = vsel %vm1211, %v1127, %v1143
        %v1225 = vsel %vm1211, %v1128, %v1144
        %v1226 = vsel %vm1211, %v1129, %v1145
        %v1227 = vsel %vm1211, %v1130, %v1146
        %vm1228 = vcmask 15360
        %1229 = vst.msk [vmem:[%s261] sm:$0xff] %vm1228, %v1212
        %1230 = vst.msk [vmem:[%s261 + $0x8] sm:$0xff] %vm1228, %v1213
        %1231 = vst.msk [vmem:[%s261 + $0x10] sm:$0xff] %vm1228, %v1214
        %1232 = vst.msk [vmem:[%s261 + $0x18] sm:$0xff] %vm1228, %v1215
        %1233 = vst.msk [vmem:[%s261 + $0x20] sm:$0xff] %vm1228, %v1216
        %1234 = vst.msk [vmem:[%s261 + $0x28] sm:$0xff] %vm1228, %v1217
        %1235 = vst.msk [vmem:[%s261 + $0x30] sm:$0xff] %vm1228, %v1218
        %1236 = vst.msk [vmem:[%s261 + $0x38] sm:$0xff] %vm1228, %v1219
        %1237 = vst.msk [vmem:[%s261 + $0x40] sm:$0xff] %vm1228, %v1220
        %1238 = vst.msk [vmem:[%s261 + $0x48] sm:$0xff] %vm1228, %v1221
        %1239 = vst.msk [vmem:[%s261 + $0x50] sm:$0xff] %vm1228, %v1222
        %1240 = vst.msk [vmem:[%s261 + $0x58] sm:$0xff] %vm1228, %v1223
        %1241 = vst.msk [vmem:[%s261 + $0x60] sm:$0xff] %vm1228, %v1224
        %1242 = vst.msk [vmem:[%s261 + $0x68] sm:$0xff] %vm1228, %v1225
        %1243 = vst.msk [vmem:[%s261 + $0x70] sm:$0xff] %vm1228, %v1226
        %1244 = vst.msk [vmem:[%s261 + $0x78] sm:$0xff] %vm1228, %v1227
        %s1245 = sand.u32 %s119, 1
        %s1246 = sand.u32 %s119, 1
        %s1247 = smul.addr %s1246, 128
        %s1248 = scalar_lea.vmem [#allocation2], %s1247
        %s1249 = sand.u32 %s145, 1
        %s1250 = sand.u32 %s145, 1
        %s1251 = smul.addr %s1250, 128
        %s1252 = scalar_lea.vmem [#allocation3], %s1251
        // Predicated region
        $region37: #{tpu_custom_call.1} parent=35 // pred_check
          %p1253 = pneg %p129
        $region38: #{tpu_custom_call.1} parent=35 // pred_check_branch
          %1255 = sbr.rel (%p1253) target = $region40
        $region39: #{tpu_custom_call.1} parent=35 // pred_region
          %s1256 = smul.u32 16, %s17
          %s1257 = ssub.s32 26, %s1256
          %p1258 = scmp.lt.s32.totalorder %s1257, 16
          %s1259 = scalar_select %p1258, %s1257, 16
          %s1260 = smul.u32 128, %s1259
          %p1261 = scmp.ne.s32.totalorder 0, %s1260
          %s1262 = smul.addr %s1256, 8
          %s1263 = scalar_lea.vmem %s4, %s1262
          // Predicated region
          $region41: #{tpu_custom_call.1} parent=39 // pred_check
            %p1264 = pneg %p1261
          $region42: #{tpu_custom_call.1} parent=39 // pred_check_branch
            %1266 = sbr.rel (%p1264) target = $region44
          $region43: #{tpu_custom_call.1} parent=39 // pred_region
            // Predicated region
            $region45: #{tpu_custom_call.1} parent=43 // pred_check
              _
            $region46: #{tpu_custom_call.1} parent=43 // pred_check_branch
              %1268 = sbr.rel (0) target = $region48
            $region47: #{tpu_custom_call.1} parent=43 // pred_region
              // Predicated region
              $region67: #{tpu_custom_call.1} parent=47 // pred_check
                _
              $region68: #{tpu_custom_call.1} parent=47 // pred_check_branch
                %1347 = sbr.rel (0) target = $region70
              $region69: #{tpu_custom_call.1} parent=47 // pred_region
                %s1348 = sshrl.u32 %s1259, 4
                // While loop
                $region71: #{tpu_custom_call.1} parent=69 // loop_pre_header
                  _
                $region72: #{tpu_custom_call.1} parent=69 // loop_header
                  %s1350 = sphi 0, %s1352
                  %p1351 = scmp.ge.s32.totalorder %s1350, %s1348
                  %s1355 = sphi 0, %s1392
                  %s1356 = sphi %s1248, %s1395
                  %s1357 = sphi %s1263, %s1396
                $region73: #{tpu_custom_call.1} parent=69 // loop_header_branch
                  %1354 = sbr.rel (%p1351) target = $region77
                $region74: #{tpu_custom_call.1} parent=69 // loop_body
                  %v1358 = vld [vmem:[%s1356] sm:$0xff]
                  %1359 = vst [vmem:[%s1357] sm:$0xff] %v1358
                  %v1360 = vld [vmem:[%s1356 + $0x8] sm:$0xff]
                  %1361 = vst [vmem:[%s1357 + $0x8] sm:$0xff] %v1360
                  %v1362 = vld [vmem:[%s1356 + $0x10] sm:$0xff]
                  %1363 = vst [vmem:[%s1357 + $0x10] sm:$0xff] %v1362
                  %v1364 = vld [vmem:[%s1356 + $0x18] sm:$0xff]
                  %1365 = vst [vmem:[%s1357 + $0x18] sm:$0xff] %v1364
                  %v1366 = vld [vmem:[%s1356 + $0x20] sm:$0xff]
                  %1367 = vst [vmem:[%s1357 + $0x20] sm:$0xff] %v1366
                  %v1368 = vld [vmem:[%s1356 + $0x28] sm:$0xff]
                  %1369 = vst [vmem:[%s1357 + $0x28] sm:$0xff] %v1368
                  %v1370 = vld [vmem:[%s1356 + $0x30] sm:$0xff]
                  %1371 = vst [vmem:[%s1357 + $0x30] sm:$0xff] %v1370
                  %v1372 = vld [vmem:[%s1356 + $0x38] sm:$0xff]
                  %1373 = vst [vmem:[%s1357 + $0x38] sm:$0xff] %v1372
                  %v1374 = vld [vmem:[%s1356 + $0x40] sm:$0xff]
                  %1375 = vst [vmem:[%s1357 + $0x40] sm:$0xff] %v1374
                  %v1376 = vld [vmem:[%s1356 + $0x48] sm:$0xff]
                  %1377 = vst [vmem:[%s1357 + $0x48] sm:$0xff] %v1376
                  %v1378 = vld [vmem:[%s1356 + $0x50] sm:$0xff]
                  %1379 = vst [vmem:[%s1357 + $0x50] sm:$0xff] %v1378
                  %v1380 = vld [vmem:[%s1356 + $0x58] sm:$0xff]
                  %1381 = vst [vmem:[%s1357 + $0x58] sm:$0xff] %v1380
                  %v1382 = vld [vmem:[%s1356 + $0x60] sm:$0xff]
                  %1383 = vst [vmem:[%s1357 + $0x60] sm:$0xff] %v1382
                  %v1384 = vld [vmem:[%s1356 + $0x68] sm:$0xff]
                  %1385 = vst [vmem:[%s1357 + $0x68] sm:$0xff] %v1384
                  %v1386 = vld [vmem:[%s1356 + $0x70] sm:$0xff]
                  %1387 = vst [vmem:[%s1357 + $0x70] sm:$0xff] %v1386
                  %v1388 = vld [vmem:[%s1356 + $0x78] sm:$0xff]
                  %1389 = vst [vmem:[%s1357 + $0x78] sm:$0xff] %v1388
                  %s1390 = sadd.s32 1, %s1355
                  %p1391 = scmp.ge.s32.totalorder %s1390, %s1348
                  %s1392 = scalar_select %p1391, 0, %s1390
                  %s1393 = smul.u32 %s1392, 128
                  %s1394 = smul.u32 %s1392, 128
                  %s1395 = scalar_lea.vmem %s1248, %s1393 [#allocation2]
                  %s1396 = scalar_lea.vmem %s1263, %s1394
                $region75: #{tpu_custom_call.1} parent=69 // loop_footer
                  %s1352 = sadd.s32 %s1350, 1
                $region76: #{tpu_custom_call.1} parent=69 // loop_footer_branch
                  %1349 = sbr.rel target = $region72
                $region77: #{tpu_custom_call.1} parent=69 // loop_exit
                  _
                %s1397 = sshrl.u32 %s1259, 4
                %s1398 = sand.u32 %s1259, 15
                %s1399 = smul.u32 %s1397, 16
                %s1400 = smul.u32 8, %s1399
                %s1401 = scalar_lea.vmem %s1248, %s1400 [#allocation2]
                %s1402 = smul.u32 8, %s1399
                %s1403 = scalar_lea.vmem %s1263, %s1402
                // While loop
                $region78: #{tpu_custom_call.1} parent=69 // loop_pre_header
                  _
                $region79: #{tpu_custom_call.1} parent=69 // loop_header
                  %s1405 = sphi 0, %s1407
                  %p1406 = scmp.ge.s32.totalorder %s1405, %s1398
                  %s1410 = sphi 0, %s1417
                  %s1411 = sphi %s1401, %s1420
                  %s1412 = sphi %s1403, %s1421
                $region80: #{tpu_custom_call.1} parent=69 // loop_header_branch
                  %1409 = sbr.rel (%p1406) target = $region84
                $region81: #{tpu_custom_call.1} parent=69 // loop_body
                  %v1413 = vld [vmem:[%s1411] sm:$0xff]
                  %1414 = vst [vmem:[%s1412] sm:$0xff] %v1413
                  %s1415 = sadd.s32 1, %s1410
                  %p1416 = scmp.ge.s32.totalorder %s1415, %s1398
                  %s1417 = scalar_select %p1416, 0, %s1415
                  %s1418 = smul.u32 %s1417, 8
                  %s1419 = smul.u32 %s1417, 8
                  %s1420 = scalar_lea.vmem %s1401, %s1418 [#allocation2]
                  %s1421 = scalar_lea.vmem %s1403, %s1419
                $region82: #{tpu_custom_call.1} parent=69 // loop_footer
                  %s1407 = sadd.s32 %s1405, 1
                $region83: #{tpu_custom_call.1} parent=69 // loop_footer_branch
                  %1404 = sbr.rel target = $region79
                $region84: #{tpu_custom_call.1} parent=69 // loop_exit
                  _
              $region70: #{tpu_custom_call.1} parent=47 // pred_fallthru
                _
              // Predicated region
              $region85: #{tpu_custom_call.1} parent=47 // pred_check
                _
              $region86: #{tpu_custom_call.1} parent=47 // pred_check_branch
                %1423 = sbr.rel target = $region88
              $region87: #{tpu_custom_call.1} parent=47 // pred_region
                _
              $region88: #{tpu_custom_call.1} parent=47 // pred_fallthru
                _
            $region48: #{tpu_custom_call.1} parent=43 // pred_fallthru
              _
            // Predicated region
            $region49: #{tpu_custom_call.1} parent=43 // pred_check
              _
            $region50: #{tpu_custom_call.1} parent=43 // pred_check_branch
              %1270 = sbr.rel target = $region52
            $region51: #{tpu_custom_call.1} parent=43 // pred_region
              %s1272 = sshrl.u32 %s1259, 4
              // While loop
              $region53: #{tpu_custom_call.1} parent=51 // loop_pre_header
                _
              $region54: #{tpu_custom_call.1} parent=51 // loop_header
                %s1274 = sphi 0, %s1276
                %p1275 = scmp.ge.s32.totalorder %s1274, %s1272
                %s1279 = sphi 0, %s1316
                %s1280 = sphi %s1248, %s1319
                %s1281 = sphi %s1263, %s1320
              $region55: #{tpu_custom_call.1} parent=51 // loop_header_branch
                %1278 = sbr.rel (%p1275) target = $region59
              $region56: #{tpu_custom_call.1} parent=51 // loop_body
                %v1282 = vld [vmem:[%s1280] sm:$0xff]
                %1283 = vst [vmem:[%s1281] sm:$0xff] %v1282
                %v1284 = vld [vmem:[%s1280 + $0x8] sm:$0xff]
                %1285 = vst [vmem:[%s1281 + $0x8] sm:$0xff] %v1284
                %v1286 = vld [vmem:[%s1280 + $0x10] sm:$0xff]
                %1287 = vst [vmem:[%s1281 + $0x10] sm:$0xff] %v1286
                %v1288 = vld [vmem:[%s1280 + $0x18] sm:$0xff]
                %1289 = vst [vmem:[%s1281 + $0x18] sm:$0xff] %v1288
                %v1290 = vld [vmem:[%s1280 + $0x20] sm:$0xff]
                %1291 = vst [vmem:[%s1281 + $0x20] sm:$0xff] %v1290
                %v1292 = vld [vmem:[%s1280 + $0x28] sm:$0xff]
                %1293 = vst [vmem:[%s1281 + $0x28] sm:$0xff] %v1292
                %v1294 = vld [vmem:[%s1280 + $0x30] sm:$0xff]
                %1295 = vst [vmem:[%s1281 + $0x30] sm:$0xff] %v1294
                %v1296 = vld [vmem:[%s1280 + $0x38] sm:$0xff]
                %1297 = vst [vmem:[%s1281 + $0x38] sm:$0xff] %v1296
                %v1298 = vld [vmem:[%s1280 + $0x40] sm:$0xff]
                %1299 = vst [vmem:[%s1281 + $0x40] sm:$0xff] %v1298
                %v1300 = vld [vmem:[%s1280 + $0x48] sm:$0xff]
                %1301 = vst [vmem:[%s1281 + $0x48] sm:$0xff] %v1300
                %v1302 = vld [vmem:[%s1280 + $0x50] sm:$0xff]
                %1303 = vst [vmem:[%s1281 + $0x50] sm:$0xff] %v1302
                %v1304 = vld [vmem:[%s1280 + $0x58] sm:$0xff]
                %1305 = vst [vmem:[%s1281 + $0x58] sm:$0xff] %v1304
                %v1306 = vld [vmem:[%s1280 + $0x60] sm:$0xff]
                %1307 = vst [vmem:[%s1281 + $0x60] sm:$0xff] %v1306
                %v1308 = vld [vmem:[%s1280 + $0x68] sm:$0xff]
                %1309 = vst [vmem:[%s1281 + $0x68] sm:$0xff] %v1308
                %v1310 = vld [vmem:[%s1280 + $0x70] sm:$0xff]
                %1311 = vst [vmem:[%s1281 + $0x70] sm:$0xff] %v1310
                %v1312 = vld [vmem:[%s1280 + $0x78] sm:$0xff]
                %1313 = vst [vmem:[%s1281 + $0x78] sm:$0xff] %v1312
                %s1314 = sadd.s32 1, %s1279
                %p1315 = scmp.ge.s32.totalorder %s1314, %s1272
                %s1316 = scalar_select %p1315, 0, %s1314
                %s1317 = smul.u32 %s1316, 128
                %s1318 = smul.u32 %s1316, 128
                %s1319 = scalar_lea.vmem %s1248, %s1317 [#allocation2]
                %s1320 = scalar_lea.vmem %s1263, %s1318
              $region57: #{tpu_custom_call.1} parent=51 // loop_footer
                %s1276 = sadd.s32 %s1274, 1
              $region58: #{tpu_custom_call.1} parent=51 // loop_footer_branch
                %1273 = sbr.rel target = $region54
              $region59: #{tpu_custom_call.1} parent=51 // loop_exit
                _
              %s1321 = sshrl.u32 %s1259, 4
              %s1322 = sand.u32 %s1259, 15
              %s1323 = smul.u32 %s1321, 16
              %s1324 = smul.u32 8, %s1323
              %s1325 = scalar_lea.vmem %s1248, %s1324 [#allocation2]
              %s1326 = smul.u32 8, %s1323
              %s1327 = scalar_lea.vmem %s1263, %s1326
              // While loop
              $region60: #{tpu_custom_call.1} parent=51 // loop_pre_header
                _
              $region61: #{tpu_custom_call.1} parent=51 // loop_header
                %s1329 = sphi 0, %s1331
                %p1330 = scmp.ge.s32.totalorder %s1329, %s1322
                %s1334 = sphi 0, %s1341
                %s1335 = sphi %s1325, %s1344
                %s1336 = sphi %s1327, %s1345
              $region62: #{tpu_custom_call.1} parent=51 // loop_header_branch
                %1333 = sbr.rel (%p1330) target = $region66
              $region63: #{tpu_custom_call.1} parent=51 // loop_body
                %v1337 = vld [vmem:[%s1335] sm:$0xff]
                %1338 = vst [vmem:[%s1336] sm:$0xff] %v1337
                %s1339 = sadd.s32 1, %s1334
                %p1340 = scmp.ge.s32.totalorder %s1339, %s1322
                %s1341 = scalar_select %p1340, 0, %s1339
                %s1342 = smul.u32 %s1341, 8
                %s1343 = smul.u32 %s1341, 8
                %s1344 = scalar_lea.vmem %s1325, %s1342 [#allocation2]
                %s1345 = scalar_lea.vmem %s1327, %s1343
              $region64: #{tpu_custom_call.1} parent=51 // loop_footer
                %s1331 = sadd.s32 %s1329, 1
              $region65: #{tpu_custom_call.1} parent=51 // loop_footer_branch
                %1328 = sbr.rel target = $region61
              $region66: #{tpu_custom_call.1} parent=51 // loop_exit
                _
            $region52: #{tpu_custom_call.1} parent=43 // pred_fallthru
              _
          $region44: #{tpu_custom_call.1} parent=39 // pred_fallthru
            _
          %1424 = vnop
        $region40: #{tpu_custom_call.1} parent=35 // pred_fallthru
          _
        // Predicated region
        $region89: #{tpu_custom_call.1} parent=35 // pred_check
          %p1425 = pneg %p155
        $region90: #{tpu_custom_call.1} parent=35 // pred_check_branch
          %1427 = sbr.rel (%p1425) target = $region92
        $region91: #{tpu_custom_call.1} parent=35 // pred_region
          %s1428 = smul.u32 16, %s17
          %s1429 = ssub.s32 26, %s1428
          %p1430 = scmp.lt.s32.totalorder %s1429, 16
          %s1431 = scalar_select %p1430, %s1429, 16
          %s1432 = smul.u32 128, %s1431
          %p1433 = scmp.ne.s32.totalorder 0, %s1432
          %s1434 = smul.addr %s1428, 8
          %s1435 = scalar_lea.vmem %s5, %s1434
          // Predicated region
          $region93: #{tpu_custom_call.1} parent=91 // pred_check
            %p1436 = pneg %p1433
          $region94: #{tpu_custom_call.1} parent=91 // pred_check_branch
            %1438 = sbr.rel (%p1436) target = $region96
          $region95: #{tpu_custom_call.1} parent=91 // pred_region
            // Predicated region
            $region97: #{tpu_custom_call.1} parent=95 // pred_check
              _
            $region98: #{tpu_custom_call.1} parent=95 // pred_check_branch
              %1440 = sbr.rel (0) target = $region100
            $region99: #{tpu_custom_call.1} parent=95 // pred_region
              // Predicated region
              $region119: #{tpu_custom_call.1} parent=99 // pred_check
                _
              $region120: #{tpu_custom_call.1} parent=99 // pred_check_branch
                %1519 = sbr.rel (0) target = $region122
              $region121: #{tpu_custom_call.1} parent=99 // pred_region
                %s1520 = sshrl.u32 %s1431, 4
                // While loop
                $region123: #{tpu_custom_call.1} parent=121 // loop_pre_header
                  _
                $region124: #{tpu_custom_call.1} parent=121 // loop_header
                  %s1522 = sphi 0, %s1524
                  %p1523 = scmp.ge.s32.totalorder %s1522, %s1520
                  %s1527 = sphi 0, %s1564
                  %s1528 = sphi %s1252, %s1567
                  %s1529 = sphi %s1435, %s1568
                $region125: #{tpu_custom_call.1} parent=121 // loop_header_branch
                  %1526 = sbr.rel (%p1523) target = $region129
                $region126: #{tpu_custom_call.1} parent=121 // loop_body
                  %v1530 = vld [vmem:[%s1528] sm:$0xff]
                  %1531 = vst [vmem:[%s1529] sm:$0xff] %v1530
                  %v1532 = vld [vmem:[%s1528 + $0x8] sm:$0xff]
                  %1533 = vst [vmem:[%s1529 + $0x8] sm:$0xff] %v1532
                  %v1534 = vld [vmem:[%s1528 + $0x10] sm:$0xff]
                  %1535 = vst [vmem:[%s1529 + $0x10] sm:$0xff] %v1534
                  %v1536 = vld [vmem:[%s1528 + $0x18] sm:$0xff]
                  %1537 = vst [vmem:[%s1529 + $0x18] sm:$0xff] %v1536
                  %v1538 = vld [vmem:[%s1528 + $0x20] sm:$0xff]
                  %1539 = vst [vmem:[%s1529 + $0x20] sm:$0xff] %v1538
                  %v1540 = vld [vmem:[%s1528 + $0x28] sm:$0xff]
                  %1541 = vst [vmem:[%s1529 + $0x28] sm:$0xff] %v1540
                  %v1542 = vld [vmem:[%s1528 + $0x30] sm:$0xff]
                  %1543 = vst [vmem:[%s1529 + $0x30] sm:$0xff] %v1542
                  %v1544 = vld [vmem:[%s1528 + $0x38] sm:$0xff]
                  %1545 = vst [vmem:[%s1529 + $0x38] sm:$0xff] %v1544
                  %v1546 = vld [vmem:[%s1528 + $0x40] sm:$0xff]
                  %1547 = vst [vmem:[%s1529 + $0x40] sm:$0xff] %v1546
                  %v1548 = vld [vmem:[%s1528 + $0x48] sm:$0xff]
                  %1549 = vst [vmem:[%s1529 + $0x48] sm:$0xff] %v1548
                  %v1550 = vld [vmem:[%s1528 + $0x50] sm:$0xff]
                  %1551 = vst [vmem:[%s1529 + $0x50] sm:$0xff] %v1550
                  %v1552 = vld [vmem:[%s1528 + $0x58] sm:$0xff]
                  %1553 = vst [vmem:[%s1529 + $0x58] sm:$0xff] %v1552
                  %v1554 = vld [vmem:[%s1528 + $0x60] sm:$0xff]
                  %1555 = vst [vmem:[%s1529 + $0x60] sm:$0xff] %v1554
                  %v1556 = vld [vmem:[%s1528 + $0x68] sm:$0xff]
                  %1557 = vst [vmem:[%s1529 + $0x68] sm:$0xff] %v1556
                  %v1558 = vld [vmem:[%s1528 + $0x70] sm:$0xff]
                  %1559 = vst [vmem:[%s1529 + $0x70] sm:$0xff] %v1558
                  %v1560 = vld [vmem:[%s1528 + $0x78] sm:$0xff]
                  %1561 = vst [vmem:[%s1529 + $0x78] sm:$0xff] %v1560
                  %s1562 = sadd.s32 1, %s1527
                  %p1563 = scmp.ge.s32.totalorder %s1562, %s1520
                  %s1564 = scalar_select %p1563, 0, %s1562
                  %s1565 = smul.u32 %s1564, 128
                  %s1566 = smul.u32 %s1564, 128
                  %s1567 = scalar_lea.vmem %s1252, %s1565 [#allocation3]
                  %s1568 = scalar_lea.vmem %s1435, %s1566
                $region127: #{tpu_custom_call.1} parent=121 // loop_footer
                  %s1524 = sadd.s32 %s1522, 1
                $region128: #{tpu_custom_call.1} parent=121 // loop_footer_branch
                  %1521 = sbr.rel target = $region124
                $region129: #{tpu_custom_call.1} parent=121 // loop_exit
                  _
                %s1569 = sshrl.u32 %s1431, 4
                %s1570 = sand.u32 %s1431, 15
                %s1571 = smul.u32 %s1569, 16
                %s1572 = smul.u32 8, %s1571
                %s1573 = scalar_lea.vmem %s1252, %s1572 [#allocation3]
                %s1574 = smul.u32 8, %s1571
                %s1575 = scalar_lea.vmem %s1435, %s1574
                // While loop
                $region130: #{tpu_custom_call.1} parent=121 // loop_pre_header
                  _
                $region131: #{tpu_custom_call.1} parent=121 // loop_header
                  %s1577 = sphi 0, %s1579
                  %p1578 = scmp.ge.s32.totalorder %s1577, %s1570
                  %s1582 = sphi 0, %s1589
                  %s1583 = sphi %s1573, %s1592
                  %s1584 = sphi %s1575, %s1593
                $region132: #{tpu_custom_call.1} parent=121 // loop_header_branch
                  %1581 = sbr.rel (%p1578) target = $region136
                $region133: #{tpu_custom_call.1} parent=121 // loop_body
                  %v1585 = vld [vmem:[%s1583] sm:$0xff]
                  %1586 = vst [vmem:[%s1584] sm:$0xff] %v1585
                  %s1587 = sadd.s32 1, %s1582
                  %p1588 = scmp.ge.s32.totalorder %s1587, %s1570
                  %s1589 = scalar_select %p1588, 0, %s1587
                  %s1590 = smul.u32 %s1589, 8
                  %s1591 = smul.u32 %s1589, 8
                  %s1592 = scalar_lea.vmem %s1573, %s1590 [#allocation3]
                  %s1593 = scalar_lea.vmem %s1575, %s1591
                $region134: #{tpu_custom_call.1} parent=121 // loop_footer
                  %s1579 = sadd.s32 %s1577, 1
                $region135: #{tpu_custom_call.1} parent=121 // loop_footer_branch
                  %1576 = sbr.rel target = $region131
                $region136: #{tpu_custom_call.1} parent=121 // loop_exit
                  _
              $region122: #{tpu_custom_call.1} parent=99 // pred_fallthru
                _
              // Predicated region
              $region137: #{tpu_custom_call.1} parent=99 // pred_check
                _
              $region138: #{tpu_custom_call.1} parent=99 // pred_check_branch
                %1595 = sbr.rel target = $region140
              $region139: #{tpu_custom_call.1} parent=99 // pred_region
                _
              $region140: #{tpu_custom_call.1} parent=99 // pred_fallthru
                _
            $region100: #{tpu_custom_call.1} parent=95 // pred_fallthru
              _
            // Predicated region
            $region101: #{tpu_custom_call.1} parent=95 // pred_check
              _
            $region102: #{tpu_custom_call.1} parent=95 // pred_check_branch
              %1442 = sbr.rel target = $region104
            $region103: #{tpu_custom_call.1} parent=95 // pred_region
              %s1444 = sshrl.u32 %s1431, 4
              // While loop
              $region105: #{tpu_custom_call.1} parent=103 // loop_pre_header
                _
              $region106: #{tpu_custom_call.1} parent=103 // loop_header
                %s1446 = sphi 0, %s1448
                %p1447 = scmp.ge.s32.totalorder %s1446, %s1444
                %s1451 = sphi 0, %s1488
                %s1452 = sphi %s1252, %s1491
                %s1453 = sphi %s1435, %s1492
              $region107: #{tpu_custom_call.1} parent=103 // loop_header_branch
                %1450 = sbr.rel (%p1447) target = $region111
              $region108: #{tpu_custom_call.1} parent=103 // loop_body
                %v1454 = vld [vmem:[%s1452] sm:$0xff]
                %1455 = vst [vmem:[%s1453] sm:$0xff] %v1454
                %v1456 = vld [vmem:[%s1452 + $0x8] sm:$0xff]
                %1457 = vst [vmem:[%s1453 + $0x8] sm:$0xff] %v1456
                %v1458 = vld [vmem:[%s1452 + $0x10] sm:$0xff]
                %1459 = vst [vmem:[%s1453 + $0x10] sm:$0xff] %v1458
                %v1460 = vld [vmem:[%s1452 + $0x18] sm:$0xff]
                %1461 = vst [vmem:[%s1453 + $0x18] sm:$0xff] %v1460
                %v1462 = vld [vmem:[%s1452 + $0x20] sm:$0xff]
                %1463 = vst [vmem:[%s1453 + $0x20] sm:$0xff] %v1462
                %v1464 = vld [vmem:[%s1452 + $0x28] sm:$0xff]
                %1465 = vst [vmem:[%s1453 + $0x28] sm:$0xff] %v1464
                %v1466 = vld [vmem:[%s1452 + $0x30] sm:$0xff]
                %1467 = vst [vmem:[%s1453 + $0x30] sm:$0xff] %v1466
                %v1468 = vld [vmem:[%s1452 + $0x38] sm:$0xff]
                %1469 = vst [vmem:[%s1453 + $0x38] sm:$0xff] %v1468
                %v1470 = vld [vmem:[%s1452 + $0x40] sm:$0xff]
                %1471 = vst [vmem:[%s1453 + $0x40] sm:$0xff] %v1470
                %v1472 = vld [vmem:[%s1452 + $0x48] sm:$0xff]
                %1473 = vst [vmem:[%s1453 + $0x48] sm:$0xff] %v1472
                %v1474 = vld [vmem:[%s1452 + $0x50] sm:$0xff]
                %1475 = vst [vmem:[%s1453 + $0x50] sm:$0xff] %v1474
                %v1476 = vld [vmem:[%s1452 + $0x58] sm:$0xff]
                %1477 = vst [vmem:[%s1453 + $0x58] sm:$0xff] %v1476
                %v1478 = vld [vmem:[%s1452 + $0x60] sm:$0xff]
                %1479 = vst [vmem:[%s1453 + $0x60] sm:$0xff] %v1478
                %v1480 = vld [vmem:[%s1452 + $0x68] sm:$0xff]
                %1481 = vst [vmem:[%s1453 + $0x68] sm:$0xff] %v1480
                %v1482 = vld [vmem:[%s1452 + $0x70] sm:$0xff]
                %1483 = vst [vmem:[%s1453 + $0x70] sm:$0xff] %v1482
                %v1484 = vld [vmem:[%s1452 + $0x78] sm:$0xff]
                %1485 = vst [vmem:[%s1453 + $0x78] sm:$0xff] %v1484
                %s1486 = sadd.s32 1, %s1451
                %p1487 = scmp.ge.s32.totalorder %s1486, %s1444
                %s1488 = scalar_select %p1487, 0, %s1486
                %s1489 = smul.u32 %s1488, 128
                %s1490 = smul.u32 %s1488, 128
                %s1491 = scalar_lea.vmem %s1252, %s1489 [#allocation3]
                %s1492 = scalar_lea.vmem %s1435, %s1490
              $region109: #{tpu_custom_call.1} parent=103 // loop_footer
                %s1448 = sadd.s32 %s1446, 1
              $region110: #{tpu_custom_call.1} parent=103 // loop_footer_branch
                %1445 = sbr.rel target = $region106
              $region111: #{tpu_custom_call.1} parent=103 // loop_exit
                _
              %s1493 = sshrl.u32 %s1431, 4
              %s1494 = sand.u32 %s1431, 15
              %s1495 = smul.u32 %s1493, 16
              %s1496 = smul.u32 8, %s1495
              %s1497 = scalar_lea.vmem %s1252, %s1496 [#allocation3]
              %s1498 = smul.u32 8, %s1495
              %s1499 = scalar_lea.vmem %s1435, %s1498
              // While loop
              $region112: #{tpu_custom_call.1} parent=103 // loop_pre_header
                _
              $region113: #{tpu_custom_call.1} parent=103 // loop_header
                %s1501 = sphi 0, %s1503
                %p1502 = scmp.ge.s32.totalorder %s1501, %s1494
                %s1506 = sphi 0, %s1513
                %s1507 = sphi %s1497, %s1516
                %s1508 = sphi %s1499, %s1517
              $region114: #{tpu_custom_call.1} parent=103 // loop_header_branch
                %1505 = sbr.rel (%p1502) target = $region118
              $region115: #{tpu_custom_call.1} parent=103 // loop_body
                %v1509 = vld [vmem:[%s1507] sm:$0xff]
                %1510 = vst [vmem:[%s1508] sm:$0xff] %v1509
                %s1511 = sadd.s32 1, %s1506
                %p1512 = scmp.ge.s32.totalorder %s1511, %s1494
                %s1513 = scalar_select %p1512, 0, %s1511
                %s1514 = smul.u32 %s1513, 8
                %s1515 = smul.u32 %s1513, 8
                %s1516 = scalar_lea.vmem %s1497, %s1514 [#allocation3]
                %s1517 = scalar_lea.vmem %s1499, %s1515
              $region116: #{tpu_custom_call.1} parent=103 // loop_footer
                %s1503 = sadd.s32 %s1501, 1
              $region117: #{tpu_custom_call.1} parent=103 // loop_footer_branch
                %1500 = sbr.rel target = $region113
              $region118: #{tpu_custom_call.1} parent=103 // loop_exit
                _
            $region104: #{tpu_custom_call.1} parent=95 // pred_fallthru
              _
          $region96: #{tpu_custom_call.1} parent=91 // pred_fallthru
            _
          %1596 = vnop
        $region92: #{tpu_custom_call.1} parent=35 // pred_fallthru
          _
      $region36: #{tpu_custom_call.1} parent=5 // pred_fallthru
        _
      %p1597 = scmp.le.s32.totalorder 2, %s12
      // Predicated region
      $region141: #{tpu_custom_call.1} parent=5 // pred_check
        %p1598 = pneg %p1597
      $region142: #{tpu_custom_call.1} parent=5 // pred_check_branch
        %1600 = sbr.rel (%p1598) target = $region144
      $region143: #{tpu_custom_call.1} parent=5 // pred_region
        %s1601 = ssub.s32 %s12, 2
        // Predicated region
        $region145: #{tpu_custom_call.1} parent=143 // pred_check
          %p1602 = pneg %p135
        $region146: #{tpu_custom_call.1} parent=143 // pred_check_branch
          %1604 = sbr.rel (%p1602) target = $region148
        $region147: #{tpu_custom_call.1} parent=143 // pred_region
          %s1605 = sand.u32 %s120, 1
          %s1606 = sand.u32 %s120, 1
          %s1607 = smul.addr %s1606, 128
          %s1608 = scalar_lea.vmem [#allocation2], %s1607
        $region148: #{tpu_custom_call.1} parent=143 // pred_fallthru
          _
        // Predicated region
        $region149: #{tpu_custom_call.1} parent=143 // pred_check
          %p1609 = pneg %p161
        $region150: #{tpu_custom_call.1} parent=143 // pred_check_branch
          %1611 = sbr.rel (%p1609) target = $region152
        $region151: #{tpu_custom_call.1} parent=143 // pred_region
          %s1612 = sand.u32 %s146, 1
          %s1613 = sand.u32 %s146, 1
          %s1614 = smul.addr %s1613, 128
          %s1615 = scalar_lea.vmem [#allocation3], %s1614
        $region152: #{tpu_custom_call.1} parent=143 // pred_fallthru
          _
      $region144: #{tpu_custom_call.1} parent=5 // pred_fallthru
        _
    $region6: #{tpu_custom_call.1} parent=1 // loop_footer
      %s16 = sadd.s32 1, %s12
    $region7: #{tpu_custom_call.1} parent=1 // loop_footer_branch
      %11 = sbr.rel target = $region3
    $region8: #{tpu_custom_call.1} parent=1 // loop_exit
      _

</llo_original>
